<compile_context>
chip_gen: v7x
topology: tpu7x:2x2x1
jax: 0.10.0
libtpu: 0.0.40
codegen_flags: <defaults>
</compile_context>

<pallas_src>
import functools
import math

import jax
import jax.numpy as jnp
from jax import lax
from jax.experimental import pallas as pl
from jax.experimental.pallas import tpu as pltpu


# ----------------------------------------------------------------------------
# Helpers
# ----------------------------------------------------------------------------
def _round_up(x, m):
    return (x + m - 1) // m * m


def _nbytes(shape, dtype):
    return math.prod(shape) * jnp.dtype(dtype).itemsize


def _pick_time_chunk(T, target=16):
    """Largest divisor of T that is <= target (timesteps per grid step)."""
    for tc in range(min(T, target), 0, -1):
        if T % tc == 0:
            return tc
    return 1


# ----------------------------------------------------------------------------
# Kernel
# ----------------------------------------------------------------------------
def _lstm_seq_kernel(xproj_ref, h0_ref, c0_ref, whT_ref, hs_ref, cs_ref,
                     h_scr, c_scr, *, hidden_pad, time_chunk):
    """One time-chunk of the LSTM recurrence; grid axis 0 iterates chunks.

    xproj_ref : (Tc, B, 4*Hp) f32   precomputed x@WxT + bias for this chunk
    h0/c0     : (B, Hp)             initial state (read only at chunk == 0)
    whT_ref   : (Hp, 4*Hp)          resident recurrent weight (bf16 or f32)
    hs/cs_ref : (Tc, B, Hp)         per-chunk outputs (new_h / new_c per step)
    h_scr/c_scr : (B, Hp) f32       recurrent carry across chunks
    """
    Hp = hidden_pad
    chunk = pl.program_id(0)

    @pl.when(chunk == 0)
    def _():
        h_scr[...] = h0_ref[...].astype(jnp.float32)
        c_scr[...] = c0_ref[...].astype(jnp.float32)

    wh = whT_ref[...]            # resident for all chunks (constant index_map)
    cdt = wh.dtype               # MXU push dtype (bf16 by default)

    def step(t, carry):
        h, c = carry             # f32 (B, Hp) held in vregs across the unroll
        gates = xproj_ref[t] + jnp.dot(h.astype(cdt), wh,
                                       preferred_element_type=jnp.float32)
        # Gate blocks are Hp-wide -> lane-aligned slices (no XLU relayout).
        fio = jax.nn.sigmoid(gates[:, : 3 * Hp])
        f = fio[:, 0 * Hp: 1 * Hp]
        i = fio[:, 1 * Hp: 2 * Hp]
        o = fio[:, 2 * Hp: 3 * Hp]
        u = jnp.tanh(gates[:, 3 * Hp:])
        new_c = i * u + f * c
        new_h = o * jnp.tanh(new_c)
        hs_ref[t] = new_h.astype(hs_ref.dtype)
        cs_ref[t] = new_c.astype(cs_ref.dtype)
        return new_h, new_c

    h, c = lax.fori_loop(0, time_chunk, step, (h_scr[...], c_scr[...]),
                         unroll=True)

    # Carry the recurrence to the next chunk in f32 VMEM scratch.
    h_scr[...] = h
    c_scr[...] = c


# ----------------------------------------------------------------------------
# Parameter prep (one-time; hoisted out of the per-step / per-call path)
# ----------------------------------------------------------------------------
def prepare_params(weight, bias, input_size, hidden_size,
                   param_dtype=jnp.bfloat16):
    """Split / transpose / lane-pad the PyTorch parameters.

    weight: (4H, input_size + H)  PyTorch layout, gate order f,i,o,u
    bias:   (4H,)
    Returns (WxT, WhT, bias2d, Hp) with
      WxT  : (input_size, 4*Hp)  (used by the hoisted x-projection matmul)
      WhT  : (Hp, 4*Hp)          (resident in the recurrent kernel)
      bias : (1, 4*Hp) f32
      Hp   : H rounded up to a multiple of 128 (lane-aligned gate blocks).
    Padded gate columns / rows are zero, so padded h/c lanes stay exactly 0.
    """
    H, I = hidden_size, input_size
    Hp = _round_up(H, 128)
    Gp = 4 * Hp

    wx_t = jnp.asarray(weight[:, :I]).T.astype(jnp.float32)   # (I, 4H)
    wh_t = jnp.asarray(weight[:, I:]).T.astype(jnp.float32)   # (H, 4H)
    b = jnp.asarray(bias).astype(jnp.float32)                  # (4H,)

    def scatter_gates(m):
        # (rows, 4H) -> (rows, 4Hp): each gate block lands on an Hp-wide,
        # lane-aligned slot [g*Hp, g*Hp + H); the rest stays zero.
        rows = m.shape[0]
        out = jnp.zeros((rows, Gp), dtype=m.dtype)
        for g in range(4):
            out = out.at[:, g * Hp: g * Hp + H].set(m[:, g * H:(g + 1) * H])
        return out

    wxT = scatter_gates(wx_t)                                        # (I, Gp)
    whT = jnp.zeros((Hp, Gp), jnp.float32).at[:H].set(scatter_gates(wh_t))
    b2 = jnp.zeros((1, Gp), jnp.float32)
    for g in range(4):
        b2 = b2.at[0, g * Hp: g * Hp + H].set(b[g * H:(g + 1) * H])

    return wxT.astype(param_dtype), whT.astype(param_dtype), b2, Hp


# ----------------------------------------------------------------------------
# Wrappers
# ----------------------------------------------------------------------------
def lstm_sequence(xs, h0, c0, params, *, hidden_size, time_chunk=None,
                  out_dtype=None):
    """Apply the LSTM cell over a sequence in ONE fused pallas_call.

    xs: (T, B, input_size); h0, c0: (B, H).
    Returns (hs, cs), each (T, B, H): the state after every step (step t is
    exactly the PyTorch module's forward()).
    """
    wxT, whT, b2, Hp = params
    T, B, I = xs.shape
    H = hidden_size
    Gp = 4 * Hp
    out_dtype = out_dtype or xs.dtype

    Tc = time_chunk if time_chunk is not None else _pick_time_chunk(T)
    assert T % Tc == 0, "time_chunk must divide T"

    # --- Hoisted x-path projection: one large, MXU-friendly matmul ----------
    xproj = jnp.dot(xs.reshape(T * B, I).astype(wxT.dtype), wxT,
                    preferred_element_type=jnp.float32)
    xproj = (xproj.reshape(T, B, Gp) + b2).astype(jnp.float32)

    # Pad the initial state to the lane-aligned Hp (padded lanes stay zero).
    if Hp != H:
        h0p = jnp.zeros((B, Hp), h0.dtype).at[:, :H].set(h0)
        c0p = jnp.zeros((B, Hp), c0.dtype).at[:, :H].set(c0)
    else:
        h0p, c0p = h0, c0

    kernel = functools.partial(_lstm_seq_kernel, hidden_pad=Hp, time_chunk=Tc)

    # Rough VMEM budget (double-buffered streamed operands + resident weight).
    vmem_est = (
        2 * _nbytes((Tc, B, Gp), jnp.float32)            # xproj chunks
        + 2 * _nbytes((Hp, Gp), whT.dtype)               # resident WhT
        + 2 * (_nbytes((B, Hp), h0p.dtype) + _nbytes((B, Hp), c0p.dtype))
        + 2 * 2 * _nbytes((Tc, B, Hp), out_dtype)        # hs, cs chunks
        + 2 * _nbytes((B, Hp), jnp.float32)              # carry scratch
    )
    vmem_limit = int(min(max(2 * vmem_est, 16 << 20), 64 << 20))

    cost = pl.CostEstimate(
        flops=int(2 * T * B * Hp * Gp),                  # recurrent h @ WhT
        transcendentals=int(5 * T * B * Hp),             # 3 sigmoid + 2 tanh
        bytes_accessed=int(_nbytes((T, B, Gp), jnp.float32)
                           + _nbytes((Hp, Gp), whT.dtype)
                           + 2 * _nbytes((T, B, Hp), out_dtype)
                           + 2 * _nbytes((B, Hp), h0p.dtype)),
    )

    hs, cs = pl.pallas_call(
        kernel,
        out_shape=(jax.ShapeDtypeStruct((T, B, Hp), out_dtype),
                   jax.ShapeDtypeStruct((T, B, Hp), out_dtype)),
        grid=(T // Tc,),
        in_specs=[
            pl.BlockSpec((Tc, B, Gp), lambda t: (t, 0, 0)),   # xproj (streamed)
            pl.BlockSpec((B, Hp), lambda t: (0, 0)),          # h0 (resident)
            pl.BlockSpec((B, Hp), lambda t: (0, 0)),          # c0 (resident)
            # Resident recurrent weight; for very large H on v7x, single-buffer
            # with pipeline_mode=pl.Buffered(1) or tile the 4*Hp gate axis.
            pl.BlockSpec((Hp, Gp), lambda t: (0, 0)),
        ],
        out_specs=(pl.BlockSpec((Tc, B, Hp), lambda t: (t, 0, 0)),
                   pl.BlockSpec((Tc, B, Hp), lambda t: (t, 0, 0))),
        scratch_shapes=[
            pltpu.VMEM((B, Hp), jnp.float32),   # h carry
            pltpu.VMEM((B, Hp), jnp.float32),   # c carry
        ],
        compiler_params=pltpu.CompilerParams(
            # Time recurrence is inherently sequential.
            dimension_semantics=("arbitrary",),
            vmem_limit_bytes=vmem_limit,
        ),
        cost_estimate=cost,
    )(xproj, h0p, c0p, whT)

    if Hp != H:
        hs = hs[..., :H]
        cs = cs[..., :H]
    return hs, cs


def lstm_cell(x, h, c, params, *, hidden_size):
    """Single-step forward — exactly the PyTorch module's forward()."""
    hs, cs = lstm_sequence(x[None], h, c, params, hidden_size=hidden_size,
                           time_chunk=1)
    return hs[0], cs[0]


# ----------------------------------------------------------------------------
# Pure-JAX reference (mirrors the PyTorch forward)
# ----------------------------------------------------------------------------
def _xavier_uniform(key, shape, dtype=jnp.float32):
    fan_out, fan_in = shape
    bound = jnp.sqrt(6.0 / (fan_in + fan_out))
    return jax.random.uniform(key, shape, dtype=dtype, minval=-bound, maxval=bound)


def _reference_step(weight, bias, hidden_size, x, h, c):
    H = hidden_size
    cat = jnp.concatenate([x, h], axis=1)
    lin = cat @ weight.T + bias
    fio = jax.nn.sigmoid(lin[:, : 3 * H])
    f, i, o = fio[:, :H], fio[:, H:2 * H], fio[:, 2 * H:3 * H]
    u = jnp.tanh(lin[:, 3 * H:])
    new_c = i * u + f * c
    new_h = o * jnp.tanh(new_c)
    return new_h, new_c


def _reference_sequence(xs, h0, c0, weight, bias, hidden_size):
    def step(carry, x):
        h, c = carry
        nh, nc = _reference_step(weight, bias, hidden_size, x, h, c)
        return (nh, nc), (nh, nc)

    _, (hs, cs) = jax.lax.scan(step, (h0, c0), xs)
    return hs, cs


# ----------------------------------------------------------------------------
# Self-test
# ----------------------------------------------------------------------------
if __name__ == "__main__":
    key = jax.random.PRNGKey(0)
    k_w, k_b, k_x, k_h, k_c = jax.random.split(key, 5)

    batch = 2
    input_size = 16
    hidden_size = 32
    seq_len = 8
    in_features = input_size + hidden_size
    out_features = 4 * hidden_size

    weight = _xavier_uniform(k_w, (out_features, in_features))
    bias = 0.1 * jax.random.normal(k_b, (out_features,), dtype=jnp.float32)

    xs = jax.random.normal(k_x, (seq_len, batch, input_size), dtype=jnp.float32)
    h0 = jax.random.normal(k_h, (batch, hidden_size), dtype=jnp.float32)
    c0 = jax.random.normal(k_c, (batch, hidden_size), dtype=jnp.float32)

    ref_hs, ref_cs = _reference_sequence(xs, h0, c0, weight, bias, hidden_size)

    # --- fused sequence, f32 resident weights (tight check) -------------------
    params32 = prepare_params(weight, bias, input_size, hidden_size,
                              param_dtype=jnp.float32)
    hs, cs = lstm_sequence(xs, h0, c0, params32, hidden_size=hidden_size)
    jax.block_until_ready((hs, cs))
    assert hs.shape == (seq_len, batch, hidden_size)
    assert cs.shape == (seq_len, batch, hidden_size)
    assert jnp.allclose(hs, ref_hs, atol=1e-4, rtol=1e-4)
    assert jnp.allclose(cs, ref_cs, atol=1e-4, rtol=1e-4)

    # --- single-step API == module.forward -------------------------------------
    nh, nc = lstm_cell(xs[0], h0, c0, params32, hidden_size=hidden_size)
    jax.block_until_ready((nh, nc))
    ref_h1, ref_c1 = _reference_step(weight, bias, hidden_size, xs[0], h0, c0)
    assert jnp.allclose(nh, ref_h1, atol=1e-4, rtol=1e-4)
    assert jnp.allclose(nc, ref_c1, atol=1e-4, rtol=1e-4)

    # --- bf16 resident weights (default), f32 accumulation/carry ---------------
    params16 = prepare_params(weight, bias, input_size, hidden_size)
    hs16, cs16 = lstm_sequence(xs, h0, c0, params16, hidden_size=hidden_size)
    jax.block_until_ready((hs16, cs16))
    assert jnp.allclose(hs16, ref_hs, atol=5e-2, rtol=5e-2)
    assert jnp.allclose(cs16, ref_cs, atol=5e-2, rtol=5e-2)

    print("KERNEL_OK")
</pallas_src>

<mosaic_0001>
module attributes {stable_mosaic.version = 11 : i64} {
  func.func @_lstm_seq_kernel(%arg0: i32, %arg1: memref<8x2x512xf32, #tpu.memory_space<vmem>>, %arg2: memref<2x128xf32, #tpu.memory_space<vmem>>, %arg3: memref<2x128xf32, #tpu.memory_space<vmem>>, %arg4: memref<128x512xf32, #tpu.memory_space<vmem>>, %arg5: memref<8x2x128xf32, #tpu.memory_space<vmem>>, %arg6: memref<8x2x128xf32, #tpu.memory_space<vmem>>, %arg7: memref<2x128xf32, #tpu.memory_space<vmem>>, %arg8: memref<2x128xf32, #tpu.memory_space<vmem>>) attributes {dimension_semantics = [#tpu.dimension_semantics<arbitrary>], iteration_bounds = array<i64: 1>, scalar_prefetch = 0 : i64, scratch_operands = 2 : i64, tpu.core_type = #tpu.core_type<tc>, window_params = [{transform_indices = @transform_0, window_bounds = array<i64: 8, 2, 512>}, {pipeline_mode = #tpu.pipeline_mode<synchronous>, transform_indices = @transform_1, window_bounds = array<i64: 2, 128>}, {pipeline_mode = #tpu.pipeline_mode<synchronous>, transform_indices = @transform_2, window_bounds = array<i64: 2, 128>}, {pipeline_mode = #tpu.pipeline_mode<synchronous>, transform_indices = @transform_3, window_bounds = array<i64: 128, 512>}, {transform_indices = @transform_4, window_bounds = array<i64: 8, 2, 128>}, {transform_indices = @transform_5, window_bounds = array<i64: 8, 2, 128>}]} {
    %c0_i32 = arith.constant 0 : i32
    %0 = arith.cmpi eq, %arg0, %c0_i32 : i32
    %1 = arith.extui %0 : i1 to i32
    %c0_i32_0 = arith.constant 0 : i32
    %2 = arith.cmpi ne, %1, %c0_i32_0 : i32
    scf.if %2 {
      %c0_74 = arith.constant 0 : index
      %c0_75 = arith.constant 0 : index
      %240 = vector.load %arg2[%c0_74, %c0_75] : memref<2x128xf32, #tpu.memory_space<vmem>>, vector<2x128xf32>
      %c0_76 = arith.constant 0 : index
      %c0_77 = arith.constant 0 : index
      %241 = vector.load %arg7[%c0_76, %c0_77] : memref<2x128xf32, #tpu.memory_space<vmem>>, vector<2x128xf32>
      tpu.vector_store %arg7[%c0_76, %c0_77], %240 {strides = array<i32>} : memref<2x128xf32, #tpu.memory_space<vmem>>, vector<2x128xf32>,
      %c0_78 = arith.constant 0 : index
      %c0_79 = arith.constant 0 : index
      %242 = vector.load %arg3[%c0_78, %c0_79] : memref<2x128xf32, #tpu.memory_space<vmem>>, vector<2x128xf32>
      %c0_80 = arith.constant 0 : index
      %c0_81 = arith.constant 0 : index
      %243 = vector.load %arg8[%c0_80, %c0_81] : memref<2x128xf32, #tpu.memory_space<vmem>>, vector<2x128xf32>
      tpu.vector_store %arg8[%c0_80, %c0_81], %242 {strides = array<i32>} : memref<2x128xf32, #tpu.memory_space<vmem>>, vector<2x128xf32>,
    } else {
    }
    %c0 = arith.constant 0 : index
    %c0_1 = arith.constant 0 : index
    %3 = vector.load %arg4[%c0, %c0_1] : memref<128x512xf32, #tpu.memory_space<vmem>>, vector<128x512xf32>
    %c0_2 = arith.constant 0 : index
    %c0_3 = arith.constant 0 : index
    %4 = vector.load %arg7[%c0_2, %c0_3] : memref<2x128xf32, #tpu.memory_space<vmem>>, vector<2x128xf32>
    %c0_4 = arith.constant 0 : index
    %c0_5 = arith.constant 0 : index
    %5 = vector.load %arg8[%c0_4, %c0_5] : memref<2x128xf32, #tpu.memory_space<vmem>>, vector<2x128xf32>
    %c0_i32_6 = arith.constant 0 : i32
    %6 = arith.index_cast %c0_i32_6 : i32 to index
    %c0_7 = arith.constant 0 : index
    %c0_8 = arith.constant 0 : index
    %7 = vector.load %arg1[%6, %c0_7, %c0_8] : memref<8x2x512xf32, #tpu.memory_space<vmem>>, vector<1x2x512xf32>
    %8 = vector.shape_cast %7 : vector<1x2x512xf32> to vector<2x512xf32>
    %cst = arith.constant dense<0.000000e+00> : vector<2x512xf32>
    %9 = tpu.matmul %4, %3, %cst {dimension_numbers = #tpu.dot_dimension_numbers<[1], [0], [0], [1], [0, 0, 1, 1], [], []>} : vector<2x128xf32>, vector<128x512xf32>, vector<2x512xf32> -> vector<2x512xf32>
    %10 = arith.addf %8, %9 : vector<2x512xf32>
    %11 = vector.extract_strided_slice %10 {offsets = [0, 0], sizes = [2, 384], strides = [1, 1]} : vector<2x512xf32> to vector<2x384xf32>
    %12 = arith.negf %11 : vector<2x384xf32>
    %13 = math.exp %12 : vector<2x384xf32>
    %cst_9 = arith.constant 1.000000e+00 : f32
    %14 = vector.broadcast %cst_9 : f32 to vector<2x384xf32>
    %15 = arith.addf %14, %13 : vector<2x384xf32>
    %16 = arith.divf %14, %15 : vector<2x384xf32>
    %17 = vector.extract_strided_slice %16 {offsets = [0, 0], sizes = [2, 128], strides = [1, 1]} : vector<2x384xf32> to vector<2x128xf32>
    %18 = vector.extract_strided_slice %16 {offsets = [0, 128], sizes = [2, 128], strides = [1, 1]} : vector<2x384xf32> to vector<2x128xf32>
    %19 = vector.extract_strided_slice %16 {offsets = [0, 256], sizes = [2, 128], strides = [1, 1]} : vector<2x384xf32> to vector<2x128xf32>
    %20 = vector.extract_strided_slice %10 {offsets = [0, 384], sizes = [2, 128], strides = [1, 1]} : vector<2x512xf32> to vector<2x128xf32>
    %21 = math.tanh %20 : vector<2x128xf32>
    %22 = arith.mulf %18, %21 : vector<2x128xf32>
    %23 = arith.mulf %17, %5 : vector<2x128xf32>
    %24 = arith.addf %22, %23 : vector<2x128xf32>
    %25 = math.tanh %24 : vector<2x128xf32>
    %26 = arith.mulf %19, %25 : vector<2x128xf32>
    %27 = arith.index_cast %c0_i32_6 : i32 to index
    %c0_10 = arith.constant 0 : index
    %c0_11 = arith.constant 0 : index
    %28 = vector.load %arg5[%27, %c0_10, %c0_11] : memref<8x2x128xf32, #tpu.memory_space<vmem>>, vector<1x2x128xf32>
    %29 = vector.shape_cast %28 : vector<1x2x128xf32> to vector<2x128xf32>
    %30 = vector.shape_cast %26 : vector<2x128xf32> to vector<1x2x128xf32>
    tpu.vector_store %arg5[%27, %c0_10, %c0_11], %30 {strides = array<i32>} : memref<8x2x128xf32, #tpu.memory_space<vmem>>, vector<1x2x128xf32>,
    %31 = arith.index_cast %c0_i32_6 : i32 to index
    %c0_12 = arith.constant 0 : index
    %c0_13 = arith.constant 0 : index
    %32 = vector.load %arg6[%31, %c0_12, %c0_13] : memref<8x2x128xf32, #tpu.memory_space<vmem>>, vector<1x2x128xf32>
    %33 = vector.shape_cast %32 : vector<1x2x128xf32> to vector<2x128xf32>
    %34 = vector.shape_cast %24 : vector<2x128xf32> to vector<1x2x128xf32>
    tpu.vector_store %arg6[%31, %c0_12, %c0_13], %34 {strides = array<i32>} : memref<8x2x128xf32, #tpu.memory_space<vmem>>, vector<1x2x128xf32>,
    %c1_i32 = arith.constant 1 : i32
    %35 = arith.index_cast %c1_i32 : i32 to index
    %c0_14 = arith.constant 0 : index
    %c0_15 = arith.constant 0 : index
    %36 = vector.load %arg1[%35, %c0_14, %c0_15] : memref<8x2x512xf32, #tpu.memory_space<vmem>>, vector<1x2x512xf32>
    %37 = vector.shape_cast %36 : vector<1x2x512xf32> to vector<2x512xf32>
    %cst_16 = arith.constant dense<0.000000e+00> : vector<2x512xf32>
    %38 = tpu.matmul %26, %3, %cst_16 {dimension_numbers = #tpu.dot_dimension_numbers<[1], [0], [0], [1], [0, 0, 1, 1], [], []>} : vector<2x128xf32>, vector<128x512xf32>, vector<2x512xf32> -> vector<2x512xf32>
    %39 = arith.addf %37, %38 : vector<2x512xf32>
    %40 = vector.extract_strided_slice %39 {offsets = [0, 0], sizes = [2, 384], strides = [1, 1]} : vector<2x512xf32> to vector<2x384xf32>
    %41 = arith.negf %40 : vector<2x384xf32>
    %42 = math.exp %41 : vector<2x384xf32>
    %cst_17 = arith.constant 1.000000e+00 : f32
    %43 = vector.broadcast %cst_17 : f32 to vector<2x384xf32>
    %44 = arith.addf %43, %42 : vector<2x384xf32>
    %45 = arith.divf %43, %44 : vector<2x384xf32>
    %46 = vector.extract_strided_slice %45 {offsets = [0, 0], sizes = [2, 128], strides = [1, 1]} : vector<2x384xf32> to vector<2x128xf32>
    %47 = vector.extract_strided_slice %45 {offsets = [0, 128], sizes = [2, 128], strides = [1, 1]} : vector<2x384xf32> to vector<2x128xf32>
    %48 = vector.extract_strided_slice %45 {offsets = [0, 256], sizes = [2, 128], strides = [1, 1]} : vector<2x384xf32> to vector<2x128xf32>
    %49 = vector.extract_strided_slice %39 {offsets = [0, 384], sizes = [2, 128], strides = [1, 1]} : vector<2x512xf32> to vector<2x128xf32>
    %50 = math.tanh %49 : vector<2x128xf32>
    %51 = arith.mulf %47, %50 : vector<2x128xf32>
    %52 = arith.mulf %46, %24 : vector<2x128xf32>
    %53 = arith.addf %51, %52 : vector<2x128xf32>
    %54 = math.tanh %53 : vector<2x128xf32>
    %55 = arith.mulf %48, %54 : vector<2x128xf32>
    %56 = arith.index_cast %c1_i32 : i32 to index
    %c0_18 = arith.constant 0 : index
    %c0_19 = arith.constant 0 : index
    %57 = vector.load %arg5[%56, %c0_18, %c0_19] : memref<8x2x128xf32, #tpu.memory_space<vmem>>, vector<1x2x128xf32>
    %58 = vector.shape_cast %57 : vector<1x2x128xf32> to vector<2x128xf32>
    %59 = vector.shape_cast %55 : vector<2x128xf32> to vector<1x2x128xf32>
    tpu.vector_store %arg5[%56, %c0_18, %c0_19], %59 {strides = array<i32>} : memref<8x2x128xf32, #tpu.memory_space<vmem>>, vector<1x2x128xf32>,
    %60 = arith.index_cast %c1_i32 : i32 to index
    %c0_20 = arith.constant 0 : index
    %c0_21 = arith.constant 0 : index
    %61 = vector.load %arg6[%60, %c0_20, %c0_21] : memref<8x2x128xf32, #tpu.memory_space<vmem>>, vector<1x2x128xf32>
    %62 = vector.shape_cast %61 : vector<1x2x128xf32> to vector<2x128xf32>
    %63 = vector.shape_cast %53 : vector<2x128xf32> to vector<1x2x128xf32>
    tpu.vector_store %arg6[%60, %c0_20, %c0_21], %63 {strides = array<i32>} : memref<8x2x128xf32, #tpu.memory_space<vmem>>, vector<1x2x128xf32>,
    %c2_i32 = arith.constant 2 : i32
    %64 = arith.index_cast %c2_i32 : i32 to index
    %c0_22 = arith.constant 0 : index
    %c0_23 = arith.constant 0 : index
    %65 = vector.load %arg1[%64, %c0_22, %c0_23] : memref<8x2x512xf32, #tpu.memory_space<vmem>>, vector<1x2x512xf32>
    %66 = vector.shape_cast %65 : vector<1x2x512xf32> to vector<2x512xf32>
    %cst_24 = arith.constant dense<0.000000e+00> : vector<2x512xf32>
    %67 = tpu.matmul %55, %3, %cst_24 {dimension_numbers = #tpu.dot_dimension_numbers<[1], [0], [0], [1], [0, 0, 1, 1], [], []>} : vector<2x128xf32>, vector<128x512xf32>, vector<2x512xf32> -> vector<2x512xf32>
    %68 = arith.addf %66, %67 : vector<2x512xf32>
    %69 = vector.extract_strided_slice %68 {offsets = [0, 0], sizes = [2, 384], strides = [1, 1]} : vector<2x512xf32> to vector<2x384xf32>
    %70 = arith.negf %69 : vector<2x384xf32>
    %71 = math.exp %70 : vector<2x384xf32>
    %cst_25 = arith.constant 1.000000e+00 : f32
    %72 = vector.broadcast %cst_25 : f32 to vector<2x384xf32>
    %73 = arith.addf %72, %71 : vector<2x384xf32>
    %74 = arith.divf %72, %73 : vector<2x384xf32>
    %75 = vector.extract_strided_slice %74 {offsets = [0, 0], sizes = [2, 128], strides = [1, 1]} : vector<2x384xf32> to vector<2x128xf32>
    %76 = vector.extract_strided_slice %74 {offsets = [0, 128], sizes = [2, 128], strides = [1, 1]} : vector<2x384xf32> to vector<2x128xf32>
    %77 = vector.extract_strided_slice %74 {offsets = [0, 256], sizes = [2, 128], strides = [1, 1]} : vector<2x384xf32> to vector<2x128xf32>
    %78 = vector.extract_strided_slice %68 {offsets = [0, 384], sizes = [2, 128], strides = [1, 1]} : vector<2x512xf32> to vector<2x128xf32>
    %79 = math.tanh %78 : vector<2x128xf32>
    %80 = arith.mulf %76, %79 : vector<2x128xf32>
    %81 = arith.mulf %75, %53 : vector<2x128xf32>
    %82 = arith.addf %80, %81 : vector<2x128xf32>
    %83 = math.tanh %82 : vector<2x128xf32>
    %84 = arith.mulf %77, %83 : vector<2x128xf32>
    %85 = arith.index_cast %c2_i32 : i32 to index
    %c0_26 = arith.constant 0 : index
    %c0_27 = arith.constant 0 : index
    %86 = vector.load %arg5[%85, %c0_26, %c0_27] : memref<8x2x128xf32, #tpu.memory_space<vmem>>, vector<1x2x128xf32>
    %87 = vector.shape_cast %86 : vector<1x2x128xf32> to vector<2x128xf32>
    %88 = vector.shape_cast %84 : vector<2x128xf32> to vector<1x2x128xf32>
    tpu.vector_store %arg5[%85, %c0_26, %c0_27], %88 {strides = array<i32>} : memref<8x2x128xf32, #tpu.memory_space<vmem>>, vector<1x2x128xf32>,
    %89 = arith.index_cast %c2_i32 : i32 to index
    %c0_28 = arith.constant 0 : index
    %c0_29 = arith.constant 0 : index
    %90 = vector.load %arg6[%89, %c0_28, %c0_29] : memref<8x2x128xf32, #tpu.memory_space<vmem>>, vector<1x2x128xf32>
    %91 = vector.shape_cast %90 : vector<1x2x128xf32> to vector<2x128xf32>
    %92 = vector.shape_cast %82 : vector<2x128xf32> to vector<1x2x128xf32>
    tpu.vector_store %arg6[%89, %c0_28, %c0_29], %92 {strides = array<i32>} : memref<8x2x128xf32, #tpu.memory_space<vmem>>, vector<1x2x128xf32>,
    %c3_i32 = arith.constant 3 : i32
    %93 = arith.index_cast %c3_i32 : i32 to index
    %c0_30 = arith.constant 0 : index
    %c0_31 = arith.constant 0 : index
    %94 = vector.load %arg1[%93, %c0_30, %c0_31] : memref<8x2x512xf32, #tpu.memory_space<vmem>>, vector<1x2x512xf32>
    %95 = vector.shape_cast %94 : vector<1x2x512xf32> to vector<2x512xf32>
    %cst_32 = arith.constant dense<0.000000e+00> : vector<2x512xf32>
    %96 = tpu.matmul %84, %3, %cst_32 {dimension_numbers = #tpu.dot_dimension_numbers<[1], [0], [0], [1], [0, 0, 1, 1], [], []>} : vector<2x128xf32>, vector<128x512xf32>, vector<2x512xf32> -> vector<2x512xf32>
    %97 = arith.addf %95, %96 : vector<2x512xf32>
    %98 = vector.extract_strided_slice %97 {offsets = [0, 0], sizes = [2, 384], strides = [1, 1]} : vector<2x512xf32> to vector<2x384xf32>
    %99 = arith.negf %98 : vector<2x384xf32>
    %100 = math.exp %99 : vector<2x384xf32>
    %cst_33 = arith.constant 1.000000e+00 : f32
    %101 = vector.broadcast %cst_33 : f32 to vector<2x384xf32>
    %102 = arith.addf %101, %100 : vector<2x384xf32>
    %103 = arith.divf %101, %102 : vector<2x384xf32>
    %104 = vector.extract_strided_slice %103 {offsets = [0, 0], sizes = [2, 128], strides = [1, 1]} : vector<2x384xf32> to vector<2x128xf32>
    %105 = vector.extract_strided_slice %103 {offsets = [0, 128], sizes = [2, 128], strides = [1, 1]} : vector<2x384xf32> to vector<2x128xf32>
    %106 = vector.extract_strided_slice %103 {offsets = [0, 256], sizes = [2, 128], strides = [1, 1]} : vector<2x384xf32> to vector<2x128xf32>
    %107 = vector.extract_strided_slice %97 {offsets = [0, 384], sizes = [2, 128], strides = [1, 1]} : vector<2x512xf32> to vector<2x128xf32>
    %108 = math.tanh %107 : vector<2x128xf32>
    %109 = arith.mulf %105, %108 : vector<2x128xf32>
    %110 = arith.mulf %104, %82 : vector<2x128xf32>
    %111 = arith.addf %109, %110 : vector<2x128xf32>
    %112 = math.tanh %111 : vector<2x128xf32>
    %113 = arith.mulf %106, %112 : vector<2x128xf32>
    %114 = arith.index_cast %c3_i32 : i32 to index
    %c0_34 = arith.constant 0 : index
    %c0_35 = arith.constant 0 : index
    %115 = vector.load %arg5[%114, %c0_34, %c0_35] : memref<8x2x128xf32, #tpu.memory_space<vmem>>, vector<1x2x128xf32>
    %116 = vector.shape_cast %115 : vector<1x2x128xf32> to vector<2x128xf32>
    %117 = vector.shape_cast %113 : vector<2x128xf32> to vector<1x2x128xf32>
    tpu.vector_store %arg5[%114, %c0_34, %c0_35], %117 {strides = array<i32>} : memref<8x2x128xf32, #tpu.memory_space<vmem>>, vector<1x2x128xf32>,
    %118 = arith.index_cast %c3_i32 : i32 to index
    %c0_36 = arith.constant 0 : index
    %c0_37 = arith.constant 0 : index
    %119 = vector.load %arg6[%118, %c0_36, %c0_37] : memref<8x2x128xf32, #tpu.memory_space<vmem>>, vector<1x2x128xf32>
    %120 = vector.shape_cast %119 : vector<1x2x128xf32> to vector<2x128xf32>
    %121 = vector.shape_cast %111 : vector<2x128xf32> to vector<1x2x128xf32>
    tpu.vector_store %arg6[%118, %c0_36, %c0_37], %121 {strides = array<i32>} : memref<8x2x128xf32, #tpu.memory_space<vmem>>, vector<1x2x128xf32>,
    %c4_i32 = arith.constant 4 : i32
    %122 = arith.index_cast %c4_i32 : i32 to index
    %c0_38 = arith.constant 0 : index
    %c0_39 = arith.constant 0 : index
    %123 = vector.load %arg1[%122, %c0_38, %c0_39] : memref<8x2x512xf32, #tpu.memory_space<vmem>>, vector<1x2x512xf32>
    %124 = vector.shape_cast %123 : vector<1x2x512xf32> to vector<2x512xf32>
    %cst_40 = arith.constant dense<0.000000e+00> : vector<2x512xf32>
    %125 = tpu.matmul %113, %3, %cst_40 {dimension_numbers = #tpu.dot_dimension_numbers<[1], [0], [0], [1], [0, 0, 1, 1], [], []>} : vector<2x128xf32>, vector<128x512xf32>, vector<2x512xf32> -> vector<2x512xf32>
    %126 = arith.addf %124, %125 : vector<2x512xf32>
    %127 = vector.extract_strided_slice %126 {offsets = [0, 0], sizes = [2, 384], strides = [1, 1]} : vector<2x512xf32> to vector<2x384xf32>
    %128 = arith.negf %127 : vector<2x384xf32>
    %129 = math.exp %128 : vector<2x384xf32>
    %cst_41 = arith.constant 1.000000e+00 : f32
    %130 = vector.broadcast %cst_41 : f32 to vector<2x384xf32>
    %131 = arith.addf %130, %129 : vector<2x384xf32>
    %132 = arith.divf %130, %131 : vector<2x384xf32>
    %133 = vector.extract_strided_slice %132 {offsets = [0, 0], sizes = [2, 128], strides = [1, 1]} : vector<2x384xf32> to vector<2x128xf32>
    %134 = vector.extract_strided_slice %132 {offsets = [0, 128], sizes = [2, 128], strides = [1, 1]} : vector<2x384xf32> to vector<2x128xf32>
    %135 = vector.extract_strided_slice %132 {offsets = [0, 256], sizes = [2, 128], strides = [1, 1]} : vector<2x384xf32> to vector<2x128xf32>
    %136 = vector.extract_strided_slice %126 {offsets = [0, 384], sizes = [2, 128], strides = [1, 1]} : vector<2x512xf32> to vector<2x128xf32>
    %137 = math.tanh %136 : vector<2x128xf32>
    %138 = arith.mulf %134, %137 : vector<2x128xf32>
    %139 = arith.mulf %133, %111 : vector<2x128xf32>
    %140 = arith.addf %138, %139 : vector<2x128xf32>
    %141 = math.tanh %140 : vector<2x128xf32>
    %142 = arith.mulf %135, %141 : vector<2x128xf32>
    %143 = arith.index_cast %c4_i32 : i32 to index
    %c0_42 = arith.constant 0 : index
    %c0_43 = arith.constant 0 : index
    %144 = vector.load %arg5[%143, %c0_42, %c0_43] : memref<8x2x128xf32, #tpu.memory_space<vmem>>, vector<1x2x128xf32>
    %145 = vector.shape_cast %144 : vector<1x2x128xf32> to vector<2x128xf32>
    %146 = vector.shape_cast %142 : vector<2x128xf32> to vector<1x2x128xf32>
    tpu.vector_store %arg5[%143, %c0_42, %c0_43], %146 {strides = array<i32>} : memref<8x2x128xf32, #tpu.memory_space<vmem>>, vector<1x2x128xf32>,
    %147 = arith.index_cast %c4_i32 : i32 to index
    %c0_44 = arith.constant 0 : index
    %c0_45 = arith.constant 0 : index
    %148 = vector.load %arg6[%147, %c0_44, %c0_45] : memref<8x2x128xf32, #tpu.memory_space<vmem>>, vector<1x2x128xf32>
    %149 = vector.shape_cast %148 : vector<1x2x128xf32> to vector<2x128xf32>
    %150 = vector.shape_cast %140 : vector<2x128xf32> to vector<1x2x128xf32>
    tpu.vector_store %arg6[%147, %c0_44, %c0_45], %150 {strides = array<i32>} : memref<8x2x128xf32, #tpu.memory_space<vmem>>, vector<1x2x128xf32>,
    %c5_i32 = arith.constant 5 : i32
    %151 = arith.index_cast %c5_i32 : i32 to index
    %c0_46 = arith.constant 0 : index
    %c0_47 = arith.constant 0 : index
    %152 = vector.load %arg1[%151, %c0_46, %c0_47] : memref<8x2x512xf32, #tpu.memory_space<vmem>>, vector<1x2x512xf32>
    %153 = vector.shape_cast %152 : vector<1x2x512xf32> to vector<2x512xf32>
    %cst_48 = arith.constant dense<0.000000e+00> : vector<2x512xf32>
    %154 = tpu.matmul %142, %3, %cst_48 {dimension_numbers = #tpu.dot_dimension_numbers<[1], [0], [0], [1], [0, 0, 1, 1], [], []>} : vector<2x128xf32>, vector<128x512xf32>, vector<2x512xf32> -> vector<2x512xf32>
    %155 = arith.addf %153, %154 : vector<2x512xf32>
    %156 = vector.extract_strided_slice %155 {offsets = [0, 0], sizes = [2, 384], strides = [1, 1]} : vector<2x512xf32> to vector<2x384xf32>
    %157 = arith.negf %156 : vector<2x384xf32>
    %158 = math.exp %157 : vector<2x384xf32>
    %cst_49 = arith.constant 1.000000e+00 : f32
    %159 = vector.broadcast %cst_49 : f32 to vector<2x384xf32>
    %160 = arith.addf %159, %158 : vector<2x384xf32>
    %161 = arith.divf %159, %160 : vector<2x384xf32>
    %162 = vector.extract_strided_slice %161 {offsets = [0, 0], sizes = [2, 128], strides = [1, 1]} : vector<2x384xf32> to vector<2x128xf32>
    %163 = vector.extract_strided_slice %161 {offsets = [0, 128], sizes = [2, 128], strides = [1, 1]} : vector<2x384xf32> to vector<2x128xf32>
    %164 = vector.extract_strided_slice %161 {offsets = [0, 256], sizes = [2, 128], strides = [1, 1]} : vector<2x384xf32> to vector<2x128xf32>
    %165 = vector.extract_strided_slice %155 {offsets = [0, 384], sizes = [2, 128], strides = [1, 1]} : vector<2x512xf32> to vector<2x128xf32>
    %166 = math.tanh %165 : vector<2x128xf32>
    %167 = arith.mulf %163, %166 : vector<2x128xf32>
    %168 = arith.mulf %162, %140 : vector<2x128xf32>
    %169 = arith.addf %167, %168 : vector<2x128xf32>
    %170 = math.tanh %169 : vector<2x128xf32>
    %171 = arith.mulf %164, %170 : vector<2x128xf32>
    %172 = arith.index_cast %c5_i32 : i32 to index
    %c0_50 = arith.constant 0 : index
    %c0_51 = arith.constant 0 : index
    %173 = vector.load %arg5[%172, %c0_50, %c0_51] : memref<8x2x128xf32, #tpu.memory_space<vmem>>, vector<1x2x128xf32>
    %174 = vector.shape_cast %173 : vector<1x2x128xf32> to vector<2x128xf32>
    %175 = vector.shape_cast %171 : vector<2x128xf32> to vector<1x2x128xf32>
    tpu.vector_store %arg5[%172, %c0_50, %c0_51], %175 {strides = array<i32>} : memref<8x2x128xf32, #tpu.memory_space<vmem>>, vector<1x2x128xf32>,
    %176 = arith.index_cast %c5_i32 : i32 to index
    %c0_52 = arith.constant 0 : index
    %c0_53 = arith.constant 0 : index
    %177 = vector.load %arg6[%176, %c0_52, %c0_53] : memref<8x2x128xf32, #tpu.memory_space<vmem>>, vector<1x2x128xf32>
    %178 = vector.shape_cast %177 : vector<1x2x128xf32> to vector<2x128xf32>
    %179 = vector.shape_cast %169 : vector<2x128xf32> to vector<1x2x128xf32>
    tpu.vector_store %arg6[%176, %c0_52, %c0_53], %179 {strides = array<i32>} : memref<8x2x128xf32, #tpu.memory_space<vmem>>, vector<1x2x128xf32>,
    %c6_i32 = arith.constant 6 : i32
    %180 = arith.index_cast %c6_i32 : i32 to index
    %c0_54 = arith.constant 0 : index
    %c0_55 = arith.constant 0 : index
    %181 = vector.load %arg1[%180, %c0_54, %c0_55] : memref<8x2x512xf32, #tpu.memory_space<vmem>>, vector<1x2x512xf32>
    %182 = vector.shape_cast %181 : vector<1x2x512xf32> to vector<2x512xf32>
    %cst_56 = arith.constant dense<0.000000e+00> : vector<2x512xf32>
    %183 = tpu.matmul %171, %3, %cst_56 {dimension_numbers = #tpu.dot_dimension_numbers<[1], [0], [0], [1], [0, 0, 1, 1], [], []>} : vector<2x128xf32>, vector<128x512xf32>, vector<2x512xf32> -> vector<2x512xf32>
    %184 = arith.addf %182, %183 : vector<2x512xf32>
    %185 = vector.extract_strided_slice %184 {offsets = [0, 0], sizes = [2, 384], strides = [1, 1]} : vector<2x512xf32> to vector<2x384xf32>
    %186 = arith.negf %185 : vector<2x384xf32>
    %187 = math.exp %186 : vector<2x384xf32>
    %cst_57 = arith.constant 1.000000e+00 : f32
    %188 = vector.broadcast %cst_57 : f32 to vector<2x384xf32>
    %189 = arith.addf %188, %187 : vector<2x384xf32>
    %190 = arith.divf %188, %189 : vector<2x384xf32>
    %191 = vector.extract_strided_slice %190 {offsets = [0, 0], sizes = [2, 128], strides = [1, 1]} : vector<2x384xf32> to vector<2x128xf32>
    %192 = vector.extract_strided_slice %190 {offsets = [0, 128], sizes = [2, 128], strides = [1, 1]} : vector<2x384xf32> to vector<2x128xf32>
    %193 = vector.extract_strided_slice %190 {offsets = [0, 256], sizes = [2, 128], strides = [1, 1]} : vector<2x384xf32> to vector<2x128xf32>
    %194 = vector.extract_strided_slice %184 {offsets = [0, 384], sizes = [2, 128], strides = [1, 1]} : vector<2x512xf32> to vector<2x128xf32>
    %195 = math.tanh %194 : vector<2x128xf32>
    %196 = arith.mulf %192, %195 : vector<2x128xf32>
    %197 = arith.mulf %191, %169 : vector<2x128xf32>
    %198 = arith.addf %196, %197 : vector<2x128xf32>
    %199 = math.tanh %198 : vector<2x128xf32>
    %200 = arith.mulf %193, %199 : vector<2x128xf32>
    %201 = arith.index_cast %c6_i32 : i32 to index
    %c0_58 = arith.constant 0 : index
    %c0_59 = arith.constant 0 : index
    %202 = vector.load %arg5[%201, %c0_58, %c0_59] : memref<8x2x128xf32, #tpu.memory_space<vmem>>, vector<1x2x128xf32>
    %203 = vector.shape_cast %202 : vector<1x2x128xf32> to vector<2x128xf32>
    %204 = vector.shape_cast %200 : vector<2x128xf32> to vector<1x2x128xf32>
    tpu.vector_store %arg5[%201, %c0_58, %c0_59], %204 {strides = array<i32>} : memref<8x2x128xf32, #tpu.memory_space<vmem>>, vector<1x2x128xf32>,
    %205 = arith.index_cast %c6_i32 : i32 to index
    %c0_60 = arith.constant 0 : index
    %c0_61 = arith.constant 0 : index
    %206 = vector.load %arg6[%205, %c0_60, %c0_61] : memref<8x2x128xf32, #tpu.memory_space<vmem>>, vector<1x2x128xf32>
    %207 = vector.shape_cast %206 : vector<1x2x128xf32> to vector<2x128xf32>
    %208 = vector.shape_cast %198 : vector<2x128xf32> to vector<1x2x128xf32>
    tpu.vector_store %arg6[%205, %c0_60, %c0_61], %208 {strides = array<i32>} : memref<8x2x128xf32, #tpu.memory_space<vmem>>, vector<1x2x128xf32>,
    %c7_i32 = arith.constant 7 : i32
    %209 = arith.index_cast %c7_i32 : i32 to index
    %c0_62 = arith.constant 0 : index
    %c0_63 = arith.constant 0 : index
    %210 = vector.load %arg1[%209, %c0_62, %c0_63] : memref<8x2x512xf32, #tpu.memory_space<vmem>>, vector<1x2x512xf32>
    %211 = vector.shape_cast %210 : vector<1x2x512xf32> to vector<2x512xf32>
    %cst_64 = arith.constant dense<0.000000e+00> : vector<2x512xf32>
    %212 = tpu.matmul %200, %3, %cst_64 {dimension_numbers = #tpu.dot_dimension_numbers<[1], [0], [0], [1], [0, 0, 1, 1], [], []>} : vector<2x128xf32>, vector<128x512xf32>, vector<2x512xf32> -> vector<2x512xf32>
    %213 = arith.addf %211, %212 : vector<2x512xf32>
    %214 = vector.extract_strided_slice %213 {offsets = [0, 0], sizes = [2, 384], strides = [1, 1]} : vector<2x512xf32> to vector<2x384xf32>
    %215 = arith.negf %214 : vector<2x384xf32>
    %216 = math.exp %215 : vector<2x384xf32>
    %cst_65 = arith.constant 1.000000e+00 : f32
    %217 = vector.broadcast %cst_65 : f32 to vector<2x384xf32>
    %218 = arith.addf %217, %216 : vector<2x384xf32>
    %219 = arith.divf %217, %218 : vector<2x384xf32>
    %220 = vector.extract_strided_slice %219 {offsets = [0, 0], sizes = [2, 128], strides = [1, 1]} : vector<2x384xf32> to vector<2x128xf32>
    %221 = vector.extract_strided_slice %219 {offsets = [0, 128], sizes = [2, 128], strides = [1, 1]} : vector<2x384xf32> to vector<2x128xf32>
    %222 = vector.extract_strided_slice %219 {offsets = [0, 256], sizes = [2, 128], strides = [1, 1]} : vector<2x384xf32> to vector<2x128xf32>
    %223 = vector.extract_strided_slice %213 {offsets = [0, 384], sizes = [2, 128], strides = [1, 1]} : vector<2x512xf32> to vector<2x128xf32>
    %224 = math.tanh %223 : vector<2x128xf32>
    %225 = arith.mulf %221, %224 : vector<2x128xf32>
    %226 = arith.mulf %220, %198 : vector<2x128xf32>
    %227 = arith.addf %225, %226 : vector<2x128xf32>
    %228 = math.tanh %227 : vector<2x128xf32>
    %229 = arith.mulf %222, %228 : vector<2x128xf32>
    %230 = arith.index_cast %c7_i32 : i32 to index
    %c0_66 = arith.constant 0 : index
    %c0_67 = arith.constant 0 : index
    %231 = vector.load %arg5[%230, %c0_66, %c0_67] : memref<8x2x128xf32, #tpu.memory_space<vmem>>, vector<1x2x128xf32>
    %232 = vector.shape_cast %231 : vector<1x2x128xf32> to vector<2x128xf32>
    %233 = vector.shape_cast %229 : vector<2x128xf32> to vector<1x2x128xf32>
    tpu.vector_store %arg5[%230, %c0_66, %c0_67], %233 {strides = array<i32>} : memref<8x2x128xf32, #tpu.memory_space<vmem>>, vector<1x2x128xf32>,
    %234 = arith.index_cast %c7_i32 : i32 to index
    %c0_68 = arith.constant 0 : index
    %c0_69 = arith.constant 0 : index
    %235 = vector.load %arg6[%234, %c0_68, %c0_69] : memref<8x2x128xf32, #tpu.memory_space<vmem>>, vector<1x2x128xf32>
    %236 = vector.shape_cast %235 : vector<1x2x128xf32> to vector<2x128xf32>
    %237 = vector.shape_cast %227 : vector<2x128xf32> to vector<1x2x128xf32>
    tpu.vector_store %arg6[%234, %c0_68, %c0_69], %237 {strides = array<i32>} : memref<8x2x128xf32, #tpu.memory_space<vmem>>, vector<1x2x128xf32>,
    %c8_i32 = arith.constant 8 : i32
    %c0_70 = arith.constant 0 : index
    %c0_71 = arith.constant 0 : index
    %238 = vector.load %arg7[%c0_70, %c0_71] : memref<2x128xf32, #tpu.memory_space<vmem>>, vector<2x128xf32>
    tpu.vector_store %arg7[%c0_70, %c0_71], %229 {strides = array<i32>} : memref<2x128xf32, #tpu.memory_space<vmem>>, vector<2x128xf32>,
    %c0_72 = arith.constant 0 : index
    %c0_73 = arith.constant 0 : index
    %239 = vector.load %arg8[%c0_72, %c0_73] : memref<2x128xf32, #tpu.memory_space<vmem>>, vector<2x128xf32>
    tpu.vector_store %arg8[%c0_72, %c0_73], %227 {strides = array<i32>} : memref<2x128xf32, #tpu.memory_space<vmem>>, vector<2x128xf32>,
    return
  }
  func.func @transform_0(%arg0: i32) -> (i32, i32, i32) {
    %c0_i32 = arith.constant 0 : i32
    %c0_i32_0 = arith.constant 0 : i32
    %c0_i32_1 = arith.constant 0 : i32
    return %arg0, %c0_i32, %c0_i32_0 : i32, i32, i32
  }
  func.func @transform_1(%arg0: i32) -> (i32, i32) {
    %c0_i32 = arith.constant 0 : i32
    %c0_i32_0 = arith.constant 0 : i32
    %c0_i32_1 = arith.constant 0 : i32
    return %c0_i32, %c0_i32_0 : i32, i32
  }
  func.func @transform_2(%arg0: i32) -> (i32, i32) {
    %c0_i32 = arith.constant 0 : i32
    %c0_i32_0 = arith.constant 0 : i32
    %c0_i32_1 = arith.constant 0 : i32
    return %c0_i32, %c0_i32_0 : i32, i32
  }
  func.func @transform_3(%arg0: i32) -> (i32, i32) {
    %c0_i32 = arith.constant 0 : i32
    %c0_i32_0 = arith.constant 0 : i32
    %c0_i32_1 = arith.constant 0 : i32
    return %c0_i32, %c0_i32_0 : i32, i32
  }
  func.func @transform_4(%arg0: i32) -> (i32, i32, i32) {
    %c0_i32 = arith.constant 0 : i32
    %c0_i32_0 = arith.constant 0 : i32
    %c0_i32_1 = arith.constant 0 : i32
    return %arg0, %c0_i32, %c0_i32_0 : i32, i32, i32
  }
  func.func @transform_5(%arg0: i32) -> (i32, i32, i32) {
    %c0_i32 = arith.constant 0 : i32
    %c0_i32_0 = arith.constant 0 : i32
    %c0_i32_1 = arith.constant 0 : i32
    return %arg0, %c0_i32, %c0_i32_0 : i32, i32, i32
  }
}

</mosaic_0001>

<llo_original>
// kernel: tpu_custom_call.1
$region0: #{tpu_custom_call.1}
  #allocation0 [shape = 'u32[]', space=smem, size = 0x4, offset = 0x4, fixed_abs, tag = 'smem constant byte address 0x4 - core index']
  #allocation1 [shape = 'u32[144,128]{1,0:T(1,128)}', space=vmem, size = 0x12000, scoped, tag = 'internal scratch']
  #allocation2 [shape = 'f32[2,128]{1,0:T(2,128)}', space=vmem, size = 0x400, scoped, tag = 'scratch operand']
  #allocation3 [shape = 'f32[2,128]{1,0:T(2,128)}', space=vmem, size = 0x400, scoped, tag = 'scratch operand']
  %s0 = inlined_call_operand.hbm [shape: f32[8,2,512], index: 0, kind: input, shape index: {}]
  %s1 = inlined_call_operand.vmem [shape: f32[2,128], index: 1, kind: input, shape index: {}]
  %s2 = inlined_call_operand.vmem [shape: f32[2,128], index: 2, kind: input, shape index: {}]
  %s3 = inlined_call_operand.hbm [shape: f32[128,512], index: 3, kind: input, shape index: {}]
  %s4 = inlined_call_operand.hbm [shape: f32[8,2,128], index: 4, kind: output, shape index: {0}]
  %s5 = inlined_call_operand.hbm [shape: f32[8,2,128], index: 5, kind: output, shape index: {1}]
  %6 = xla_tuple %s4, %s5
  %s7 = sld [smem:[#allocation0]]
  $region46: #{tpu_custom_call.1} parent=0
    _
  %s9 = ssub.s32 1, %s7
  %s10 = scalar_select 0, %s9, %s7
  $region1: #{tpu_custom_call.1} parent=0
    #allocation4 [shape = 'u8[32768]{0}', space=vmem, size = 0x8000, scoped, tag = 'input window, operand 0, single buffered']
    #allocation5 [shape = 's32[1]{0}', space=sflag, size = 0x4, scoped, tag = 'scoped memory for tpu_custom_call.1']
    #allocation6 [shape = 's32[1]{0}', space=sflag, size = 0x4, scoped, tag = 'scoped memory for tpu_custom_call.1']
    #allocation7 [shape = 'u8[262144]{0}', space=vmem, size = 0x40000, scoped, tag = 'input window, operand 3, single buffered']
    #allocation8 [shape = 's32[1]{0}', space=sflag, size = 0x4, scoped, tag = 'scoped memory for tpu_custom_call.1']
    #allocation9 [shape = 'u8[8192]{0}', space=vmem, size = 0x2000, scoped, tag = 'output window, operand 0, single buffered']
    #allocation10 [shape = 'u8[8192]{0}', space=vmem, size = 0x2000, scoped, tag = 'output window, operand 1, single buffered']
    #allocation11 [shape = 's32[1]{0}', space=sflag, size = 0x4, scoped, tag = 'scoped memory for tpu_custom_call.1']
    %11 = vsyncpa [#allocation5], 0
    %12 = vsyncpa [#allocation8], 0
    %13 = vsyncpa [#allocation6], 0
    %14 = vsyncpa [#allocation11], 0
    // Predicated region
    $region2: #{tpu_custom_call.1} parent=1 // pred_check
      _
    $region3: #{tpu_custom_call.1} parent=1 // pred_check_branch
      %16 = sbr.rel (0) target = $region5
    $region4: #{tpu_custom_call.1} parent=1 // pred_region
      %s18 = ssub.s32 1024, 1024
      %19 = vsyncadd [#allocation5], %s18
      %s20 = sshll.u32 [#allocation4], 4
      %s21 = int_to_ptr.vmem [resolvable:$true] %s20
      %26 = dma.hbm_to_vmem [thread:$0]  %s0, 1024, %s21, [#allocation5], 128, 128, 8
    $region5: #{tpu_custom_call.1} parent=1 // pred_fallthru
      _
    // Predicated region
    $region6: #{tpu_custom_call.1} parent=1 // pred_check
      _
    $region7: #{tpu_custom_call.1} parent=1 // pred_check_branch
      %28 = sbr.rel (0) target = $region9
    $region8: #{tpu_custom_call.1} parent=1 // pred_region
      _
    $region9: #{tpu_custom_call.1} parent=1 // pred_fallthru
      _
    // Predicated region
    $region10: #{tpu_custom_call.1} parent=1 // pred_check
      _
    $region11: #{tpu_custom_call.1} parent=1 // pred_check_branch
      %30 = sbr.rel (0) target = $region13
    $region12: #{tpu_custom_call.1} parent=1 // pred_region
      _
    $region13: #{tpu_custom_call.1} parent=1 // pred_fallthru
      _
    // Predicated region
    $region14: #{tpu_custom_call.1} parent=1 // pred_check
      _
    $region15: #{tpu_custom_call.1} parent=1 // pred_check_branch
      %32 = sbr.rel (0) target = $region17
    $region16: #{tpu_custom_call.1} parent=1 // pred_region
      %s34 = ssub.s32 8192, 8192
      %35 = vsyncadd [#allocation8], %s34
      %s36 = sshll.u32 [#allocation7], 4
      %s37 = int_to_ptr.vmem [resolvable:$true] %s36
      %42 = dma.hbm_to_vmem [thread:$0]  %s3, 8192, %s37, [#allocation8], 512, 512, 32
    $region17: #{tpu_custom_call.1} parent=1 // pred_fallthru
      _
    // Predicated region
    $region18: #{tpu_custom_call.1} parent=1 // pred_check
      _
    $region19: #{tpu_custom_call.1} parent=1 // pred_check_branch
      %44 = sbr.rel (0) target = $region21
    $region20: #{tpu_custom_call.1} parent=1 // pred_region
      %45 = dma.done [#allocation5], 1024
    $region21: #{tpu_custom_call.1} parent=1 // pred_fallthru
      _
    // Predicated region
    $region22: #{tpu_custom_call.1} parent=1 // pred_check
      _
    $region23: #{tpu_custom_call.1} parent=1 // pred_check_branch
      %47 = sbr.rel (0) target = $region25
    $region24: #{tpu_custom_call.1} parent=1 // pred_region
      %48 = dma.done [#allocation8], 8192
    $region25: #{tpu_custom_call.1} parent=1 // pred_fallthru
      _
    %p49 = scmp.eq.s32.totalorder 0, 0
    // Predicated region
    $region26: #{tpu_custom_call.1} parent=1 // pred_check
      %p50 = pneg %p49
    $region27: #{tpu_custom_call.1} parent=1 // pred_check_branch
      %52 = sbr.rel (%p50) target = $region29
    $region28: #{tpu_custom_call.1} parent=1 // pred_region
      %v53 = vld [vmem:[%s1] sm:$0x3]
      %54 = vst [vmem:[#allocation2] sm:$0x3] %v53
      %v55 = vld [vmem:[%s2] sm:$0x3]
      %56 = vst [vmem:[#allocation3] sm:$0x3] %v55
    $region29: #{tpu_custom_call.1} parent=1 // pred_fallthru
      _
    %v57 = vld [vmem:[#allocation7] sm:$0xff]
    %v58 = vld [vmem:[#allocation7 + $0x8] sm:$0xff]
    %v59 = vld [vmem:[#allocation7 + $0x10] sm:$0xff]
    %v60 = vld [vmem:[#allocation7 + $0x18] sm:$0xff]
    %v61 = vld [vmem:[#allocation7 + $0x20] sm:$0xff]
    %v62 = vld [vmem:[#allocation7 + $0x28] sm:$0xff]
    %v63 = vld [vmem:[#allocation7 + $0x30] sm:$0xff]
    %v64 = vld [vmem:[#allocation7 + $0x38] sm:$0xff]
    %v65 = vld [vmem:[#allocation7 + $0x40] sm:$0xff]
    %v66 = vld [vmem:[#allocation7 + $0x48] sm:$0xff]
    %v67 = vld [vmem:[#allocation7 + $0x50] sm:$0xff]
    %v68 = vld [vmem:[#allocation7 + $0x58] sm:$0xff]
    %v69 = vld [vmem:[#allocation7 + $0x60] sm:$0xff]
    %v70 = vld [vmem:[#allocation7 + $0x68] sm:$0xff]
    %v71 = vld [vmem:[#allocation7 + $0x70] sm:$0xff]
    %v72 = vld [vmem:[#allocation7 + $0x78] sm:$0xff]
    %v73 = vld [vmem:[#allocation7 + $0x80] sm:$0xff]
    %v74 = vld [vmem:[#allocation7 + $0x88] sm:$0xff]
    %v75 = vld [vmem:[#allocation7 + $0x90] sm:$0xff]
    %v76 = vld [vmem:[#allocation7 + $0x98] sm:$0xff]
    %v77 = vld [vmem:[#allocation7 + $0xa0] sm:$0xff]
    %v78 = vld [vmem:[#allocation7 + $0xa8] sm:$0xff]
    %v79 = vld [vmem:[#allocation7 + $0xb0] sm:$0xff]
    %v80 = vld [vmem:[#allocation7 + $0xb8] sm:$0xff]
    %v81 = vld [vmem:[#allocation7 + $0xc0] sm:$0xff]
    %v82 = vld [vmem:[#allocation7 + $0xc8] sm:$0xff]
    %v83 = vld [vmem:[#allocation7 + $0xd0] sm:$0xff]
    %v84 = vld [vmem:[#allocation7 + $0xd8] sm:$0xff]
    %v85 = vld [vmem:[#allocation7 + $0xe0] sm:$0xff]
    %v86 = vld [vmem:[#allocation7 + $0xe8] sm:$0xff]
    %v87 = vld [vmem:[#allocation7 + $0xf0] sm:$0xff]
    %v88 = vld [vmem:[#allocation7 + $0xf8] sm:$0xff]
    %v89 = vld [vmem:[#allocation7 + $0x100] sm:$0xff]
    %v90 = vld [vmem:[#allocation7 + $0x108] sm:$0xff]
    %v91 = vld [vmem:[#allocation7 + $0x110] sm:$0xff]
    %v92 = vld [vmem:[#allocation7 + $0x118] sm:$0xff]
    %v93 = vld [vmem:[#allocation7 + $0x120] sm:$0xff]
    %v94 = vld [vmem:[#allocation7 + $0x128] sm:$0xff]
    %v95 = vld [vmem:[#allocation7 + $0x130] sm:$0xff]
    %v96 = vld [vmem:[#allocation7 + $0x138] sm:$0xff]
    %v97 = vld [vmem:[#allocation7 + $0x140] sm:$0xff]
    %v98 = vld [vmem:[#allocation7 + $0x148] sm:$0xff]
    %v99 = vld [vmem:[#allocation7 + $0x150] sm:$0xff]
    %v100 = vld [vmem:[#allocation7 + $0x158] sm:$0xff]
    %v101 = vld [vmem:[#allocation7 + $0x160] sm:$0xff]
    %v102 = vld [vmem:[#allocation7 + $0x168] sm:$0xff]
    %v103 = vld [vmem:[#allocation7 + $0x170] sm:$0xff]
    %v104 = vld [vmem:[#allocation7 + $0x178] sm:$0xff]
    %v105 = vld [vmem:[#allocation7 + $0x180] sm:$0xff]
    %v106 = vld [vmem:[#allocation7 + $0x188] sm:$0xff]
    %v107 = vld [vmem:[#allocation7 + $0x190] sm:$0xff]
    %v108 = vld [vmem:[#allocation7 + $0x198] sm:$0xff]
    %v109 = vld [vmem:[#allocation7 + $0x1a0] sm:$0xff]
    %v110 = vld [vmem:[#allocation7 + $0x1a8] sm:$0xff]
    %v111 = vld [vmem:[#allocation7 + $0x1b0] sm:$0xff]
    %v112 = vld [vmem:[#allocation7 + $0x1b8] sm:$0xff]
    %v113 = vld [vmem:[#allocation7 + $0x1c0] sm:$0xff]
    %v114 = vld [vmem:[#allocation7 + $0x1c8] sm:$0xff]
    %v115 = vld [vmem:[#allocation7 + $0x1d0] sm:$0xff]
    %v116 = vld [vmem:[#allocation7 + $0x1d8] sm:$0xff]
    %v117 = vld [vmem:[#allocation7 + $0x1e0] sm:$0xff]
    %v118 = vld [vmem:[#allocation7 + $0x1e8] sm:$0xff]
    %v119 = vld [vmem:[#allocation7 + $0x1f0] sm:$0xff]
    %v120 = vld [vmem:[#allocation7 + $0x1f8] sm:$0xff]
    %v121 = vld [vmem:[#allocation2] sm:$0x3]
    %v122 = vld [vmem:[#allocation3] sm:$0x3]
    %v123 = vld [vmem:[#allocation4] sm:$0xff]
    %124 = vmatprep.subr.mxu0 %v58
    %125 = vmatpush1.msra.mxu0 %v57
    %126 = vmatprep.subr.mxu0 %v62
    %127 = vmatpush1.msra.mxu0 %v61
    %128 = vmatprep.subr.mxu0 %v66
    %129 = vmatpush1.msra.mxu0 %v65
    %130 = vmatprep.subr.mxu0 %v70
    %131 = vmatpush1.msra.mxu0 %v69
    %132 = vmatprep.subr.mxu0 %v74
    %133 = vmatpush1.msra.mxu0 %v73
    %134 = vmatprep.subr.mxu0 %v78
    %135 = vmatpush1.msra.mxu0 %v77
    %136 = vmatprep.subr.mxu0 %v82
    %137 = vmatpush1.msra.mxu0 %v81
    %138 = vmatprep.subr.mxu0 %v86
    %139 = vmatpush1.msra.mxu0 %v85
    %140 = vmatprep.subr.mxu0 %v90
    %141 = vmatpush1.msra.mxu0 %v89
    %142 = vmatprep.subr.mxu0 %v94
    %143 = vmatpush1.msra.mxu0 %v93
    %144 = vmatprep.subr.mxu0 %v98
    %145 = vmatpush1.msra.mxu0 %v97
    %146 = vmatprep.subr.mxu0 %v102
    %147 = vmatpush1.msra.mxu0 %v101
    %148 = vmatprep.subr.mxu0 %v106
    %149 = vmatpush1.msra.mxu0 %v105
    %150 = vmatprep.subr.mxu0 %v110
    %151 = vmatpush1.msra.mxu0 %v109
    %152 = vmatprep.subr.mxu0 %v114
    %153 = vmatpush1.msra.mxu0 %v113
    %154 = vmatprep.subr.mxu0 %v118
    %155 = vmatpush1.msra.mxu0 %v117
    %156 = vmatprep.subr.mxu0 0.0
    %157 = vmatpush1.msra.mxu0 0.0
    %158 = vmatprep.subr.mxu0 0.0
    %159 = vmatpush1.msra.mxu0 0.0
    %160 = vmatprep.subr.mxu0 0.0
    %161 = vmatpush1.msra.mxu0 0.0
    %162 = vmatprep.subr.mxu0 0.0
    %163 = vmatpush1.msra.mxu0 0.0
    %164 = vmatprep.subr.mxu0 0.0
    %165 = vmatpush1.msra.mxu0 0.0
    %166 = vmatprep.subr.mxu0 0.0
    %167 = vmatpush1.msra.mxu0 0.0
    %168 = vmatprep.subr.mxu0 0.0
    %169 = vmatpush1.msra.mxu0 0.0
    %170 = vmatprep.subr.mxu0 0.0
    %171 = vmatpush1.msra.mxu0 0.0
    %172 = vmatprep.subr.mxu0 0.0
    %173 = vmatpush1.msra.mxu0 0.0
    %174 = vmatprep.subr.mxu0 0.0
    %175 = vmatpush1.msra.mxu0 0.0
    %176 = vmatprep.subr.mxu0 0.0
    %177 = vmatpush1.msra.mxu0 0.0
    %178 = vmatprep.subr.mxu0 0.0
    %179 = vmatpush1.msra.mxu0 0.0
    %180 = vmatprep.subr.mxu0 0.0
    %181 = vmatpush1.msra.mxu0 0.0
    %182 = vmatprep.subr.mxu0 0.0
    %183 = vmatpush1.msra.mxu0 0.0
    %184 = vmatprep.subr.mxu0 0.0
    %185 = vmatpush1.msra.mxu0 0.0
    %186 = vmatprep.subr.mxu0 0.0
    %187 = vmatpush1.msra.mxu0 0.0
    %188 = vmatprep.mubr.f32.mxu0 0.0
    %189 = vmatmul.mubr.f32.gmra.mrb[0].mxu0 %v121
    %v190 = vpop.f32.mrb[0].mxu0
    %v191 = vadd.f32 0.0, %v190
    %v192 = vpop.f32.mrb[0].mxu0
    %v193 = vadd.f32 0.0, %v192
    %194 = vdwg.mxu0
    %195 = vmatprep.subr.mxu0 %v60
    %196 = vmatpush1.msra.mxu0 %v59
    %197 = vmatprep.subr.mxu0 %v64
    %198 = vmatpush1.msra.mxu0 %v63
    %199 = vmatprep.subr.mxu0 %v68
    %200 = vmatpush1.msra.mxu0 %v67
    %201 = vmatprep.subr.mxu0 %v72
    %202 = vmatpush1.msra.mxu0 %v71
    %203 = vmatprep.subr.mxu0 %v76
    %204 = vmatpush1.msra.mxu0 %v75
    %205 = vmatprep.subr.mxu0 %v80
    %206 = vmatpush1.msra.mxu0 %v79
    %207 = vmatprep.subr.mxu0 %v84
    %208 = vmatpush1.msra.mxu0 %v83
    %209 = vmatprep.subr.mxu0 %v88
    %210 = vmatpush1.msra.mxu0 %v87
    %211 = vmatprep.subr.mxu0 %v92
    %212 = vmatpush1.msra.mxu0 %v91
    %213 = vmatprep.subr.mxu0 %v96
    %214 = vmatpush1.msra.mxu0 %v95
    %215 = vmatprep.subr.mxu0 %v100
    %216 = vmatpush1.msra.mxu0 %v99
    %217 = vmatprep.subr.mxu0 %v104
    %218 = vmatpush1.msra.mxu0 %v103
    %219 = vmatprep.subr.mxu0 %v108
    %220 = vmatpush1.msra.mxu0 %v107
    %221 = vmatprep.subr.mxu0 %v112
    %222 = vmatpush1.msra.mxu0 %v111
    %223 = vmatprep.subr.mxu0 %v116
    %224 = vmatpush1.msra.mxu0 %v115
    %225 = vmatprep.subr.mxu0 %v120
    %226 = vmatpush1.msra.mxu0 %v119
    %227 = vmatprep.subr.mxu0 0.0
    %228 = vmatpush1.msra.mxu0 0.0
    %229 = vmatprep.subr.mxu0 0.0
    %230 = vmatpush1.msra.mxu0 0.0
    %231 = vmatprep.subr.mxu0 0.0
    %232 = vmatpush1.msra.mxu0 0.0
    %233 = vmatprep.subr.mxu0 0.0
    %234 = vmatpush1.msra.mxu0 0.0
    %235 = vmatprep.subr.mxu0 0.0
    %236 = vmatpush1.msra.mxu0 0.0
    %237 = vmatprep.subr.mxu0 0.0
    %238 = vmatpush1.msra.mxu0 0.0
    %239 = vmatprep.subr.mxu0 0.0
    %240 = vmatpush1.msra.mxu0 0.0
    %241 = vmatprep.subr.mxu0 0.0
    %242 = vmatpush1.msra.mxu0 0.0
    %243 = vmatprep.subr.mxu0 0.0
    %244 = vmatpush1.msra.mxu0 0.0
    %245 = vmatprep.subr.mxu0 0.0
    %246 = vmatpush1.msra.mxu0 0.0
    %247 = vmatprep.subr.mxu0 0.0
    %248 = vmatpush1.msra.mxu0 0.0
    %249 = vmatprep.subr.mxu0 0.0
    %250 = vmatpush1.msra.mxu0 0.0
    %251 = vmatprep.subr.mxu0 0.0
    %252 = vmatpush1.msra.mxu0 0.0
    %253 = vmatprep.subr.mxu0 0.0
    %254 = vmatpush1.msra.mxu0 0.0
    %255 = vmatprep.subr.mxu0 0.0
    %256 = vmatpush1.msra.mxu0 0.0
    %257 = vmatprep.subr.mxu0 0.0
    %258 = vmatpush1.msra.mxu0 0.0
    %259 = vmatprep.mubr.f32.mxu0 0.0
    %260 = vmatmul.mubr.f32.gmra.mrb[0].mxu0 %v121
    %v261 = vpop.f32.mrb[0].mxu0
    %v262 = vadd.f32 0.0, %v261
    %v263 = vpop.f32.mrb[0].mxu0
    %v264 = vadd.f32 0.0, %v263
    %265 = vdwg.mxu0
    %v270 = vcombine.low %v191, %v193
    %v271 = vcombine.low %v262, %v264
    %v273 = vunpack.c.l.s4 1983009808
    %v274 = vunpack.c.0.s8 %v273
    %v275 = vlaneseq
    %v276 = vshrl.u32 %v275, 7
    %v277 = vsub.s32 %v274, %v276
    %v278 = vrot.slane %v270, %v277
    %v280 = vunpack.c.l.s4 1983009808
    %v281 = vunpack.c.0.s8 %v280
    %v282 = vlaneseq
    %v283 = vshrl.u32 %v282, 7
    %v284 = vsub.s32 %v281, %v283
    %v285 = vrot.slane %v271, %v284
    %v286 = vcombine.low %v278, %v285
    %v288 = vadd.f32 %v123, %v286
    %v289 = vxor.u32 %v288, 2147483648
    %v290 = vmul.f32 %v289, 1.442695
    %v291 = vpow.pop %v290
    %v292 = vadd.f32 %v291, 1.0
    %v293 = vrcp.pop %v292
    %v294 = vmul.f32 1.0, %v293
    %v296 = vrot.slane %v288, 6
    %v298 = vtanh.pop %v296
    %v300 = vrot.slane %v294, 2
    %v302 = vmul.f32 %v300, %v298
    %v303 = vmul.f32 %v294, %v122
    %v304 = vadd.f32 %v302, %v303
    %v305 = vtanh.pop %v304
    %v306 = vrot.slane %v294, 4
    %v308 = vmul.f32 %v306, %v305
    %309 = vst [vmem:[#allocation9] sm:$0x3] %v308
    %310 = vst [vmem:[#allocation10] sm:$0x3] %v304
    %s311 = scalar_lea.vmem [#allocation4], 8
    %v312 = vld [vmem:[%s311] sm:$0xff]
    %313 = vmatprep.subr.mxu0 %v58
    %314 = vmatpush1.msra.mxu0 %v57
    %315 = vmatprep.subr.mxu0 %v62
    %316 = vmatpush1.msra.mxu0 %v61
    %317 = vmatprep.subr.mxu0 %v66
    %318 = vmatpush1.msra.mxu0 %v65
    %319 = vmatprep.subr.mxu0 %v70
    %320 = vmatpush1.msra.mxu0 %v69
    %321 = vmatprep.subr.mxu0 %v74
    %322 = vmatpush1.msra.mxu0 %v73
    %323 = vmatprep.subr.mxu0 %v78
    %324 = vmatpush1.msra.mxu0 %v77
    %325 = vmatprep.subr.mxu0 %v82
    %326 = vmatpush1.msra.mxu0 %v81
    %327 = vmatprep.subr.mxu0 %v86
    %328 = vmatpush1.msra.mxu0 %v85
    %329 = vmatprep.subr.mxu0 %v90
    %330 = vmatpush1.msra.mxu0 %v89
    %331 = vmatprep.subr.mxu0 %v94
    %332 = vmatpush1.msra.mxu0 %v93
    %333 = vmatprep.subr.mxu0 %v98
    %334 = vmatpush1.msra.mxu0 %v97
    %335 = vmatprep.subr.mxu0 %v102
    %336 = vmatpush1.msra.mxu0 %v101
    %337 = vmatprep.subr.mxu0 %v106
    %338 = vmatpush1.msra.mxu0 %v105
    %339 = vmatprep.subr.mxu0 %v110
    %340 = vmatpush1.msra.mxu0 %v109
    %341 = vmatprep.subr.mxu0 %v114
    %342 = vmatpush1.msra.mxu0 %v113
    %343 = vmatprep.subr.mxu0 %v118
    %344 = vmatpush1.msra.mxu0 %v117
    %345 = vmatprep.subr.mxu0 0.0
    %346 = vmatpush1.msra.mxu0 0.0
    %347 = vmatprep.subr.mxu0 0.0
    %348 = vmatpush1.msra.mxu0 0.0
    %349 = vmatprep.subr.mxu0 0.0
    %350 = vmatpush1.msra.mxu0 0.0
    %351 = vmatprep.subr.mxu0 0.0
    %352 = vmatpush1.msra.mxu0 0.0
    %353 = vmatprep.subr.mxu0 0.0
    %354 = vmatpush1.msra.mxu0 0.0
    %355 = vmatprep.subr.mxu0 0.0
    %356 = vmatpush1.msra.mxu0 0.0
    %357 = vmatprep.subr.mxu0 0.0
    %358 = vmatpush1.msra.mxu0 0.0
    %359 = vmatprep.subr.mxu0 0.0
    %360 = vmatpush1.msra.mxu0 0.0
    %361 = vmatprep.subr.mxu0 0.0
    %362 = vmatpush1.msra.mxu0 0.0
    %363 = vmatprep.subr.mxu0 0.0
    %364 = vmatpush1.msra.mxu0 0.0
    %365 = vmatprep.subr.mxu0 0.0
    %366 = vmatpush1.msra.mxu0 0.0
    %367 = vmatprep.subr.mxu0 0.0
    %368 = vmatpush1.msra.mxu0 0.0
    %369 = vmatprep.subr.mxu0 0.0
    %370 = vmatpush1.msra.mxu0 0.0
    %371 = vmatprep.subr.mxu0 0.0
    %372 = vmatpush1.msra.mxu0 0.0
    %373 = vmatprep.subr.mxu0 0.0
    %374 = vmatpush1.msra.mxu0 0.0
    %375 = vmatprep.subr.mxu0 0.0
    %376 = vmatpush1.msra.mxu0 0.0
    %377 = vmatprep.mubr.f32.mxu0 0.0
    %378 = vmatmul.mubr.f32.gmra.mrb[0].mxu0 %v308
    %v379 = vpop.f32.mrb[0].mxu0
    %v380 = vadd.f32 0.0, %v379
    %v381 = vpop.f32.mrb[0].mxu0
    %v382 = vadd.f32 0.0, %v381
    %383 = vdwg.mxu0
    %384 = vmatprep.subr.mxu0 %v60
    %385 = vmatpush1.msra.mxu0 %v59
    %386 = vmatprep.subr.mxu0 %v64
    %387 = vmatpush1.msra.mxu0 %v63
    %388 = vmatprep.subr.mxu0 %v68
    %389 = vmatpush1.msra.mxu0 %v67
    %390 = vmatprep.subr.mxu0 %v72
    %391 = vmatpush1.msra.mxu0 %v71
    %392 = vmatprep.subr.mxu0 %v76
    %393 = vmatpush1.msra.mxu0 %v75
    %394 = vmatprep.subr.mxu0 %v80
    %395 = vmatpush1.msra.mxu0 %v79
    %396 = vmatprep.subr.mxu0 %v84
    %397 = vmatpush1.msra.mxu0 %v83
    %398 = vmatprep.subr.mxu0 %v88
    %399 = vmatpush1.msra.mxu0 %v87
    %400 = vmatprep.subr.mxu0 %v92
    %401 = vmatpush1.msra.mxu0 %v91
    %402 = vmatprep.subr.mxu0 %v96
    %403 = vmatpush1.msra.mxu0 %v95
    %404 = vmatprep.subr.mxu0 %v100
    %405 = vmatpush1.msra.mxu0 %v99
    %406 = vmatprep.subr.mxu0 %v104
    %407 = vmatpush1.msra.mxu0 %v103
    %408 = vmatprep.subr.mxu0 %v108
    %409 = vmatpush1.msra.mxu0 %v107
    %410 = vmatprep.subr.mxu0 %v112
    %411 = vmatpush1.msra.mxu0 %v111
    %412 = vmatprep.subr.mxu0 %v116
    %413 = vmatpush1.msra.mxu0 %v115
    %414 = vmatprep.subr.mxu0 %v120
    %415 = vmatpush1.msra.mxu0 %v119
    %416 = vmatprep.subr.mxu0 0.0
    %417 = vmatpush1.msra.mxu0 0.0
    %418 = vmatprep.subr.mxu0 0.0
    %419 = vmatpush1.msra.mxu0 0.0
    %420 = vmatprep.subr.mxu0 0.0
    %421 = vmatpush1.msra.mxu0 0.0
    %422 = vmatprep.subr.mxu0 0.0
    %423 = vmatpush1.msra.mxu0 0.0
    %424 = vmatprep.subr.mxu0 0.0
    %425 = vmatpush1.msra.mxu0 0.0
    %426 = vmatprep.subr.mxu0 0.0
    %427 = vmatpush1.msra.mxu0 0.0
    %428 = vmatprep.subr.mxu0 0.0
    %429 = vmatpush1.msra.mxu0 0.0
    %430 = vmatprep.subr.mxu0 0.0
    %431 = vmatpush1.msra.mxu0 0.0
    %432 = vmatprep.subr.mxu0 0.0
    %433 = vmatpush1.msra.mxu0 0.0
    %434 = vmatprep.subr.mxu0 0.0
    %435 = vmatpush1.msra.mxu0 0.0
    %436 = vmatprep.subr.mxu0 0.0
    %437 = vmatpush1.msra.mxu0 0.0
    %438 = vmatprep.subr.mxu0 0.0
    %439 = vmatpush1.msra.mxu0 0.0
    %440 = vmatprep.subr.mxu0 0.0
    %441 = vmatpush1.msra.mxu0 0.0
    %442 = vmatprep.subr.mxu0 0.0
    %443 = vmatpush1.msra.mxu0 0.0
    %444 = vmatprep.subr.mxu0 0.0
    %445 = vmatpush1.msra.mxu0 0.0
    %446 = vmatprep.subr.mxu0 0.0
    %447 = vmatpush1.msra.mxu0 0.0
    %448 = vmatprep.mubr.f32.mxu0 0.0
    %449 = vmatmul.mubr.f32.gmra.mrb[0].mxu0 %v308
    %v450 = vpop.f32.mrb[0].mxu0
    %v451 = vadd.f32 0.0, %v450
    %v452 = vpop.f32.mrb[0].mxu0
    %v453 = vadd.f32 0.0, %v452
    %454 = vdwg.mxu0
    %v459 = vcombine.low %v380, %v382
    %v460 = vcombine.low %v451, %v453
    %v462 = vunpack.c.l.s4 1983009808
    %v463 = vunpack.c.0.s8 %v462
    %v464 = vlaneseq
    %v465 = vshrl.u32 %v464, 7
    %v466 = vsub.s32 %v463, %v465
    %v467 = vrot.slane %v459, %v466
    %v469 = vunpack.c.l.s4 1983009808
    %v470 = vunpack.c.0.s8 %v469
    %v471 = vlaneseq
    %v472 = vshrl.u32 %v471, 7
    %v473 = vsub.s32 %v470, %v472
    %v474 = vrot.slane %v460, %v473
    %v475 = vcombine.low %v467, %v474
    %v477 = vadd.f32 %v312, %v475
    %v478 = vxor.u32 %v477, 2147483648
    %v479 = vmul.f32 %v478, 1.442695
    %v480 = vpow.pop %v479
    %v481 = vadd.f32 %v480, 1.0
    %v482 = vrcp.pop %v481
    %v483 = vmul.f32 1.0, %v482
    %v485 = vrot.slane %v477, 6
    %v487 = vtanh.pop %v485
    %v489 = vrot.slane %v483, 2
    %v491 = vmul.f32 %v489, %v487
    %v492 = vmul.f32 %v483, %v304
    %v493 = vadd.f32 %v491, %v492
    %v494 = vtanh.pop %v493
    %v495 = vrot.slane %v483, 4
    %v497 = vmul.f32 %v495, %v494
    %s498 = scalar_lea.vmem [#allocation9], 2
    %499 = vst [vmem:[%s498] sm:$0x3] %v497
    %s500 = scalar_lea.vmem [#allocation10], 2
    %501 = vst [vmem:[%s500] sm:$0x3] %v493
    %s502 = scalar_lea.vmem [#allocation4], 16
    %v503 = vld [vmem:[%s502] sm:$0xff]
    %504 = vmatprep.subr.mxu0 %v58
    %505 = vmatpush1.msra.mxu0 %v57
    %506 = vmatprep.subr.mxu0 %v62
    %507 = vmatpush1.msra.mxu0 %v61
    %508 = vmatprep.subr.mxu0 %v66
    %509 = vmatpush1.msra.mxu0 %v65
    %510 = vmatprep.subr.mxu0 %v70
    %511 = vmatpush1.msra.mxu0 %v69
    %512 = vmatprep.subr.mxu0 %v74
    %513 = vmatpush1.msra.mxu0 %v73
    %514 = vmatprep.subr.mxu0 %v78
    %515 = vmatpush1.msra.mxu0 %v77
    %516 = vmatprep.subr.mxu0 %v82
    %517 = vmatpush1.msra.mxu0 %v81
    %518 = vmatprep.subr.mxu0 %v86
    %519 = vmatpush1.msra.mxu0 %v85
    %520 = vmatprep.subr.mxu0 %v90
    %521 = vmatpush1.msra.mxu0 %v89
    %522 = vmatprep.subr.mxu0 %v94
    %523 = vmatpush1.msra.mxu0 %v93
    %524 = vmatprep.subr.mxu0 %v98
    %525 = vmatpush1.msra.mxu0 %v97
    %526 = vmatprep.subr.mxu0 %v102
    %527 = vmatpush1.msra.mxu0 %v101
    %528 = vmatprep.subr.mxu0 %v106
    %529 = vmatpush1.msra.mxu0 %v105
    %530 = vmatprep.subr.mxu0 %v110
    %531 = vmatpush1.msra.mxu0 %v109
    %532 = vmatprep.subr.mxu0 %v114
    %533 = vmatpush1.msra.mxu0 %v113
    %534 = vmatprep.subr.mxu0 %v118
    %535 = vmatpush1.msra.mxu0 %v117
    %536 = vmatprep.subr.mxu0 0.0
    %537 = vmatpush1.msra.mxu0 0.0
    %538 = vmatprep.subr.mxu0 0.0
    %539 = vmatpush1.msra.mxu0 0.0
    %540 = vmatprep.subr.mxu0 0.0
    %541 = vmatpush1.msra.mxu0 0.0
    %542 = vmatprep.subr.mxu0 0.0
    %543 = vmatpush1.msra.mxu0 0.0
    %544 = vmatprep.subr.mxu0 0.0
    %545 = vmatpush1.msra.mxu0 0.0
    %546 = vmatprep.subr.mxu0 0.0
    %547 = vmatpush1.msra.mxu0 0.0
    %548 = vmatprep.subr.mxu0 0.0
    %549 = vmatpush1.msra.mxu0 0.0
    %550 = vmatprep.subr.mxu0 0.0
    %551 = vmatpush1.msra.mxu0 0.0
    %552 = vmatprep.subr.mxu0 0.0
    %553 = vmatpush1.msra.mxu0 0.0
    %554 = vmatprep.subr.mxu0 0.0
    %555 = vmatpush1.msra.mxu0 0.0
    %556 = vmatprep.subr.mxu0 0.0
    %557 = vmatpush1.msra.mxu0 0.0
    %558 = vmatprep.subr.mxu0 0.0
    %559 = vmatpush1.msra.mxu0 0.0
    %560 = vmatprep.subr.mxu0 0.0
    %561 = vmatpush1.msra.mxu0 0.0
    %562 = vmatprep.subr.mxu0 0.0
    %563 = vmatpush1.msra.mxu0 0.0
    %564 = vmatprep.subr.mxu0 0.0
    %565 = vmatpush1.msra.mxu0 0.0
    %566 = vmatprep.subr.mxu0 0.0
    %567 = vmatpush1.msra.mxu0 0.0
    %568 = vmatprep.mubr.f32.mxu0 0.0
    %569 = vmatmul.mubr.f32.gmra.mrb[0].mxu0 %v497
    %v570 = vpop.f32.mrb[0].mxu0
    %v571 = vadd.f32 0.0, %v570
    %v572 = vpop.f32.mrb[0].mxu0
    %v573 = vadd.f32 0.0, %v572
    %574 = vdwg.mxu0
    %575 = vmatprep.subr.mxu0 %v60
    %576 = vmatpush1.msra.mxu0 %v59
    %577 = vmatprep.subr.mxu0 %v64
    %578 = vmatpush1.msra.mxu0 %v63
    %579 = vmatprep.subr.mxu0 %v68
    %580 = vmatpush1.msra.mxu0 %v67
    %581 = vmatprep.subr.mxu0 %v72
    %582 = vmatpush1.msra.mxu0 %v71
    %583 = vmatprep.subr.mxu0 %v76
    %584 = vmatpush1.msra.mxu0 %v75
    %585 = vmatprep.subr.mxu0 %v80
    %586 = vmatpush1.msra.mxu0 %v79
    %587 = vmatprep.subr.mxu0 %v84
    %588 = vmatpush1.msra.mxu0 %v83
    %589 = vmatprep.subr.mxu0 %v88
    %590 = vmatpush1.msra.mxu0 %v87
    %591 = vmatprep.subr.mxu0 %v92
    %592 = vmatpush1.msra.mxu0 %v91
    %593 = vmatprep.subr.mxu0 %v96
    %594 = vmatpush1.msra.mxu0 %v95
    %595 = vmatprep.subr.mxu0 %v100
    %596 = vmatpush1.msra.mxu0 %v99
    %597 = vmatprep.subr.mxu0 %v104
    %598 = vmatpush1.msra.mxu0 %v103
    %599 = vmatprep.subr.mxu0 %v108
    %600 = vmatpush1.msra.mxu0 %v107
    %601 = vmatprep.subr.mxu0 %v112
    %602 = vmatpush1.msra.mxu0 %v111
    %603 = vmatprep.subr.mxu0 %v116
    %604 = vmatpush1.msra.mxu0 %v115
    %605 = vmatprep.subr.mxu0 %v120
    %606 = vmatpush1.msra.mxu0 %v119
    %607 = vmatprep.subr.mxu0 0.0
    %608 = vmatpush1.msra.mxu0 0.0
    %609 = vmatprep.subr.mxu0 0.0
    %610 = vmatpush1.msra.mxu0 0.0
    %611 = vmatprep.subr.mxu0 0.0
    %612 = vmatpush1.msra.mxu0 0.0
    %613 = vmatprep.subr.mxu0 0.0
    %614 = vmatpush1.msra.mxu0 0.0
    %615 = vmatprep.subr.mxu0 0.0
    %616 = vmatpush1.msra.mxu0 0.0
    %617 = vmatprep.subr.mxu0 0.0
    %618 = vmatpush1.msra.mxu0 0.0
    %619 = vmatprep.subr.mxu0 0.0
    %620 = vmatpush1.msra.mxu0 0.0
    %621 = vmatprep.subr.mxu0 0.0
    %622 = vmatpush1.msra.mxu0 0.0
    %623 = vmatprep.subr.mxu0 0.0
    %624 = vmatpush1.msra.mxu0 0.0
    %625 = vmatprep.subr.mxu0 0.0
    %626 = vmatpush1.msra.mxu0 0.0
    %627 = vmatprep.subr.mxu0 0.0
    %628 = vmatpush1.msra.mxu0 0.0
    %629 = vmatprep.subr.mxu0 0.0
    %630 = vmatpush1.msra.mxu0 0.0
    %631 = vmatprep.subr.mxu0 0.0
    %632 = vmatpush1.msra.mxu0 0.0
    %633 = vmatprep.subr.mxu0 0.0
    %634 = vmatpush1.msra.mxu0 0.0
    %635 = vmatprep.subr.mxu0 0.0
    %636 = vmatpush1.msra.mxu0 0.0
    %637 = vmatprep.subr.mxu0 0.0
    %638 = vmatpush1.msra.mxu0 0.0
    %639 = vmatprep.mubr.f32.mxu0 0.0
    %640 = vmatmul.mubr.f32.gmra.mrb[0].mxu0 %v497
    %v641 = vpop.f32.mrb[0].mxu0
    %v642 = vadd.f32 0.0, %v641
    %v643 = vpop.f32.mrb[0].mxu0
    %v644 = vadd.f32 0.0, %v643
    %645 = vdwg.mxu0
    %v650 = vcombine.low %v571, %v573
    %v651 = vcombine.low %v642, %v644
    %v653 = vunpack.c.l.s4 1983009808
    %v654 = vunpack.c.0.s8 %v653
    %v655 = vlaneseq
    %v656 = vshrl.u32 %v655, 7
    %v657 = vsub.s32 %v654, %v656
    %v658 = vrot.slane %v650, %v657
    %v660 = vunpack.c.l.s4 1983009808
    %v661 = vunpack.c.0.s8 %v660
    %v662 = vlaneseq
    %v663 = vshrl.u32 %v662, 7
    %v664 = vsub.s32 %v661, %v663
    %v665 = vrot.slane %v651, %v664
    %v666 = vcombine.low %v658, %v665
    %v668 = vadd.f32 %v503, %v666
    %v669 = vxor.u32 %v668, 2147483648
    %v670 = vmul.f32 %v669, 1.442695
    %v671 = vpow.pop %v670
    %v672 = vadd.f32 %v671, 1.0
    %v673 = vrcp.pop %v672
    %v674 = vmul.f32 1.0, %v673
    %v676 = vrot.slane %v668, 6
    %v678 = vtanh.pop %v676
    %v680 = vrot.slane %v674, 2
    %v682 = vmul.f32 %v680, %v678
    %v683 = vmul.f32 %v674, %v493
    %v684 = vadd.f32 %v682, %v683
    %v685 = vtanh.pop %v684
    %v686 = vrot.slane %v674, 4
    %v688 = vmul.f32 %v686, %v685
    %s689 = scalar_lea.vmem [#allocation9], 4
    %690 = vst [vmem:[%s689] sm:$0x3] %v688
    %s691 = scalar_lea.vmem [#allocation10], 4
    %692 = vst [vmem:[%s691] sm:$0x3] %v684
    %s693 = scalar_lea.vmem [#allocation4], 24
    %v694 = vld [vmem:[%s693] sm:$0xff]
    %695 = vmatprep.subr.mxu0 %v58
    %696 = vmatpush1.msra.mxu0 %v57
    %697 = vmatprep.subr.mxu0 %v62
    %698 = vmatpush1.msra.mxu0 %v61
    %699 = vmatprep.subr.mxu0 %v66
    %700 = vmatpush1.msra.mxu0 %v65
    %701 = vmatprep.subr.mxu0 %v70
    %702 = vmatpush1.msra.mxu0 %v69
    %703 = vmatprep.subr.mxu0 %v74
    %704 = vmatpush1.msra.mxu0 %v73
    %705 = vmatprep.subr.mxu0 %v78
    %706 = vmatpush1.msra.mxu0 %v77
    %707 = vmatprep.subr.mxu0 %v82
    %708 = vmatpush1.msra.mxu0 %v81
    %709 = vmatprep.subr.mxu0 %v86
    %710 = vmatpush1.msra.mxu0 %v85
    %711 = vmatprep.subr.mxu0 %v90
    %712 = vmatpush1.msra.mxu0 %v89
    %713 = vmatprep.subr.mxu0 %v94
    %714 = vmatpush1.msra.mxu0 %v93
    %715 = vmatprep.subr.mxu0 %v98
    %716 = vmatpush1.msra.mxu0 %v97
    %717 = vmatprep.subr.mxu0 %v102
    %718 = vmatpush1.msra.mxu0 %v101
    %719 = vmatprep.subr.mxu0 %v106
    %720 = vmatpush1.msra.mxu0 %v105
    %721 = vmatprep.subr.mxu0 %v110
    %722 = vmatpush1.msra.mxu0 %v109
    %723 = vmatprep.subr.mxu0 %v114
    %724 = vmatpush1.msra.mxu0 %v113
    %725 = vmatprep.subr.mxu0 %v118
    %726 = vmatpush1.msra.mxu0 %v117
    %727 = vmatprep.subr.mxu0 0.0
    %728 = vmatpush1.msra.mxu0 0.0
    %729 = vmatprep.subr.mxu0 0.0
    %730 = vmatpush1.msra.mxu0 0.0
    %731 = vmatprep.subr.mxu0 0.0
    %732 = vmatpush1.msra.mxu0 0.0
    %733 = vmatprep.subr.mxu0 0.0
    %734 = vmatpush1.msra.mxu0 0.0
    %735 = vmatprep.subr.mxu0 0.0
    %736 = vmatpush1.msra.mxu0 0.0
    %737 = vmatprep.subr.mxu0 0.0
    %738 = vmatpush1.msra.mxu0 0.0
    %739 = vmatprep.subr.mxu0 0.0
    %740 = vmatpush1.msra.mxu0 0.0
    %741 = vmatprep.subr.mxu0 0.0
    %742 = vmatpush1.msra.mxu0 0.0
    %743 = vmatprep.subr.mxu0 0.0
    %744 = vmatpush1.msra.mxu0 0.0
    %745 = vmatprep.subr.mxu0 0.0
    %746 = vmatpush1.msra.mxu0 0.0
    %747 = vmatprep.subr.mxu0 0.0
    %748 = vmatpush1.msra.mxu0 0.0
    %749 = vmatprep.subr.mxu0 0.0
    %750 = vmatpush1.msra.mxu0 0.0
    %751 = vmatprep.subr.mxu0 0.0
    %752 = vmatpush1.msra.mxu0 0.0
    %753 = vmatprep.subr.mxu0 0.0
    %754 = vmatpush1.msra.mxu0 0.0
    %755 = vmatprep.subr.mxu0 0.0
    %756 = vmatpush1.msra.mxu0 0.0
    %757 = vmatprep.subr.mxu0 0.0
    %758 = vmatpush1.msra.mxu0 0.0
    %759 = vmatprep.mubr.f32.mxu0 0.0
    %760 = vmatmul.mubr.f32.gmra.mrb[0].mxu0 %v688
    %v761 = vpop.f32.mrb[0].mxu0
    %v762 = vadd.f32 0.0, %v761
    %v763 = vpop.f32.mrb[0].mxu0
    %v764 = vadd.f32 0.0, %v763
    %765 = vdwg.mxu0
    %766 = vmatprep.subr.mxu0 %v60
    %767 = vmatpush1.msra.mxu0 %v59
    %768 = vmatprep.subr.mxu0 %v64
    %769 = vmatpush1.msra.mxu0 %v63
    %770 = vmatprep.subr.mxu0 %v68
    %771 = vmatpush1.msra.mxu0 %v67
    %772 = vmatprep.subr.mxu0 %v72
    %773 = vmatpush1.msra.mxu0 %v71
    %774 = vmatprep.subr.mxu0 %v76
    %775 = vmatpush1.msra.mxu0 %v75
    %776 = vmatprep.subr.mxu0 %v80
    %777 = vmatpush1.msra.mxu0 %v79
    %778 = vmatprep.subr.mxu0 %v84
    %779 = vmatpush1.msra.mxu0 %v83
    %780 = vmatprep.subr.mxu0 %v88
    %781 = vmatpush1.msra.mxu0 %v87
    %782 = vmatprep.subr.mxu0 %v92
    %783 = vmatpush1.msra.mxu0 %v91
    %784 = vmatprep.subr.mxu0 %v96
    %785 = vmatpush1.msra.mxu0 %v95
    %786 = vmatprep.subr.mxu0 %v100
    %787 = vmatpush1.msra.mxu0 %v99
    %788 = vmatprep.subr.mxu0 %v104
    %789 = vmatpush1.msra.mxu0 %v103
    %790 = vmatprep.subr.mxu0 %v108
    %791 = vmatpush1.msra.mxu0 %v107
    %792 = vmatprep.subr.mxu0 %v112
    %793 = vmatpush1.msra.mxu0 %v111
    %794 = vmatprep.subr.mxu0 %v116
    %795 = vmatpush1.msra.mxu0 %v115
    %796 = vmatprep.subr.mxu0 %v120
    %797 = vmatpush1.msra.mxu0 %v119
    %798 = vmatprep.subr.mxu0 0.0
    %799 = vmatpush1.msra.mxu0 0.0
    %800 = vmatprep.subr.mxu0 0.0
    %801 = vmatpush1.msra.mxu0 0.0
    %802 = vmatprep.subr.mxu0 0.0
    %803 = vmatpush1.msra.mxu0 0.0
    %804 = vmatprep.subr.mxu0 0.0
    %805 = vmatpush1.msra.mxu0 0.0
    %806 = vmatprep.subr.mxu0 0.0
    %807 = vmatpush1.msra.mxu0 0.0
    %808 = vmatprep.subr.mxu0 0.0
    %809 = vmatpush1.msra.mxu0 0.0
    %810 = vmatprep.subr.mxu0 0.0
    %811 = vmatpush1.msra.mxu0 0.0
    %812 = vmatprep.subr.mxu0 0.0
    %813 = vmatpush1.msra.mxu0 0.0
    %814 = vmatprep.subr.mxu0 0.0
    %815 = vmatpush1.msra.mxu0 0.0
    %816 = vmatprep.subr.mxu0 0.0
    %817 = vmatpush1.msra.mxu0 0.0
    %818 = vmatprep.subr.mxu0 0.0
    %819 = vmatpush1.msra.mxu0 0.0
    %820 = vmatprep.subr.mxu0 0.0
    %821 = vmatpush1.msra.mxu0 0.0
    %822 = vmatprep.subr.mxu0 0.0
    %823 = vmatpush1.msra.mxu0 0.0
    %824 = vmatprep.subr.mxu0 0.0
    %825 = vmatpush1.msra.mxu0 0.0
    %826 = vmatprep.subr.mxu0 0.0
    %827 = vmatpush1.msra.mxu0 0.0
    %828 = vmatprep.subr.mxu0 0.0
    %829 = vmatpush1.msra.mxu0 0.0
    %830 = vmatprep.mubr.f32.mxu0 0.0
    %831 = vmatmul.mubr.f32.gmra.mrb[0].mxu0 %v688
    %v832 = vpop.f32.mrb[0].mxu0
    %v833 = vadd.f32 0.0, %v832
    %v834 = vpop.f32.mrb[0].mxu0
    %v835 = vadd.f32 0.0, %v834
    %836 = vdwg.mxu0
    %v841 = vcombine.low %v762, %v764
    %v842 = vcombine.low %v833, %v835
    %v844 = vunpack.c.l.s4 1983009808
    %v845 = vunpack.c.0.s8 %v844
    %v846 = vlaneseq
    %v847 = vshrl.u32 %v846, 7
    %v848 = vsub.s32 %v845, %v847
    %v849 = vrot.slane %v841, %v848
    %v851 = vunpack.c.l.s4 1983009808
    %v852 = vunpack.c.0.s8 %v851
    %v853 = vlaneseq
    %v854 = vshrl.u32 %v853, 7
    %v855 = vsub.s32 %v852, %v854
    %v856 = vrot.slane %v842, %v855
    %v857 = vcombine.low %v849, %v856
    %v859 = vadd.f32 %v694, %v857
    %v860 = vxor.u32 %v859, 2147483648
    %v861 = vmul.f32 %v860, 1.442695
    %v862 = vpow.pop %v861
    %v863 = vadd.f32 %v862, 1.0
    %v864 = vrcp.pop %v863
    %v865 = vmul.f32 1.0, %v864
    %v867 = vrot.slane %v859, 6
    %v869 = vtanh.pop %v867
    %v871 = vrot.slane %v865, 2
    %v873 = vmul.f32 %v871, %v869
    %v874 = vmul.f32 %v865, %v684
    %v875 = vadd.f32 %v873, %v874
    %v876 = vtanh.pop %v875
    %v877 = vrot.slane %v865, 4
    %v879 = vmul.f32 %v877, %v876
    %s880 = scalar_lea.vmem [#allocation9], 6
    %881 = vst [vmem:[%s880] sm:$0x3] %v879
    %s882 = scalar_lea.vmem [#allocation10], 6
    %883 = vst [vmem:[%s882] sm:$0x3] %v875
    %s884 = scalar_lea.vmem [#allocation4], 32
    %v885 = vld [vmem:[%s884] sm:$0xff]
    %886 = vmatprep.subr.mxu0 %v58
    %887 = vmatpush1.msra.mxu0 %v57
    %888 = vmatprep.subr.mxu0 %v62
    %889 = vmatpush1.msra.mxu0 %v61
    %890 = vmatprep.subr.mxu0 %v66
    %891 = vmatpush1.msra.mxu0 %v65
    %892 = vmatprep.subr.mxu0 %v70
    %893 = vmatpush1.msra.mxu0 %v69
    %894 = vmatprep.subr.mxu0 %v74
    %895 = vmatpush1.msra.mxu0 %v73
    %896 = vmatprep.subr.mxu0 %v78
    %897 = vmatpush1.msra.mxu0 %v77
    %898 = vmatprep.subr.mxu0 %v82
    %899 = vmatpush1.msra.mxu0 %v81
    %900 = vmatprep.subr.mxu0 %v86
    %901 = vmatpush1.msra.mxu0 %v85
    %902 = vmatprep.subr.mxu0 %v90
    %903 = vmatpush1.msra.mxu0 %v89
    %904 = vmatprep.subr.mxu0 %v94
    %905 = vmatpush1.msra.mxu0 %v93
    %906 = vmatprep.subr.mxu0 %v98
    %907 = vmatpush1.msra.mxu0 %v97
    %908 = vmatprep.subr.mxu0 %v102
    %909 = vmatpush1.msra.mxu0 %v101
    %910 = vmatprep.subr.mxu0 %v106
    %911 = vmatpush1.msra.mxu0 %v105
    %912 = vmatprep.subr.mxu0 %v110
    %913 = vmatpush1.msra.mxu0 %v109
    %914 = vmatprep.subr.mxu0 %v114
    %915 = vmatpush1.msra.mxu0 %v113
    %916 = vmatprep.subr.mxu0 %v118
    %917 = vmatpush1.msra.mxu0 %v117
    %918 = vmatprep.subr.mxu0 0.0
    %919 = vmatpush1.msra.mxu0 0.0
    %920 = vmatprep.subr.mxu0 0.0
    %921 = vmatpush1.msra.mxu0 0.0
    %922 = vmatprep.subr.mxu0 0.0
    %923 = vmatpush1.msra.mxu0 0.0
    %924 = vmatprep.subr.mxu0 0.0
    %925 = vmatpush1.msra.mxu0 0.0
    %926 = vmatprep.subr.mxu0 0.0
    %927 = vmatpush1.msra.mxu0 0.0
    %928 = vmatprep.subr.mxu0 0.0
    %929 = vmatpush1.msra.mxu0 0.0
    %930 = vmatprep.subr.mxu0 0.0
    %931 = vmatpush1.msra.mxu0 0.0
    %932 = vmatprep.subr.mxu0 0.0
    %933 = vmatpush1.msra.mxu0 0.0
    %934 = vmatprep.subr.mxu0 0.0
    %935 = vmatpush1.msra.mxu0 0.0
    %936 = vmatprep.subr.mxu0 0.0
    %937 = vmatpush1.msra.mxu0 0.0
    %938 = vmatprep.subr.mxu0 0.0
    %939 = vmatpush1.msra.mxu0 0.0
    %940 = vmatprep.subr.mxu0 0.0
    %941 = vmatpush1.msra.mxu0 0.0
    %942 = vmatprep.subr.mxu0 0.0
    %943 = vmatpush1.msra.mxu0 0.0
    %944 = vmatprep.subr.mxu0 0.0
    %945 = vmatpush1.msra.mxu0 0.0
    %946 = vmatprep.subr.mxu0 0.0
    %947 = vmatpush1.msra.mxu0 0.0
    %948 = vmatprep.subr.mxu0 0.0
    %949 = vmatpush1.msra.mxu0 0.0
    %950 = vmatprep.mubr.f32.mxu0 0.0
    %951 = vmatmul.mubr.f32.gmra.mrb[0].mxu0 %v879
    %v952 = vpop.f32.mrb[0].mxu0
    %v953 = vadd.f32 0.0, %v952
    %v954 = vpop.f32.mrb[0].mxu0
    %v955 = vadd.f32 0.0, %v954
    %956 = vdwg.mxu0
    %957 = vmatprep.subr.mxu0 %v60
    %958 = vmatpush1.msra.mxu0 %v59
    %959 = vmatprep.subr.mxu0 %v64
    %960 = vmatpush1.msra.mxu0 %v63
    %961 = vmatprep.subr.mxu0 %v68
    %962 = vmatpush1.msra.mxu0 %v67
    %963 = vmatprep.subr.mxu0 %v72
    %964 = vmatpush1.msra.mxu0 %v71
    %965 = vmatprep.subr.mxu0 %v76
    %966 = vmatpush1.msra.mxu0 %v75
    %967 = vmatprep.subr.mxu0 %v80
    %968 = vmatpush1.msra.mxu0 %v79
    %969 = vmatprep.subr.mxu0 %v84
    %970 = vmatpush1.msra.mxu0 %v83
    %971 = vmatprep.subr.mxu0 %v88
    %972 = vmatpush1.msra.mxu0 %v87
    %973 = vmatprep.subr.mxu0 %v92
    %974 = vmatpush1.msra.mxu0 %v91
    %975 = vmatprep.subr.mxu0 %v96
    %976 = vmatpush1.msra.mxu0 %v95
    %977 = vmatprep.subr.mxu0 %v100
    %978 = vmatpush1.msra.mxu0 %v99
    %979 = vmatprep.subr.mxu0 %v104
    %980 = vmatpush1.msra.mxu0 %v103
    %981 = vmatprep.subr.mxu0 %v108
    %982 = vmatpush1.msra.mxu0 %v107
    %983 = vmatprep.subr.mxu0 %v112
    %984 = vmatpush1.msra.mxu0 %v111
    %985 = vmatprep.subr.mxu0 %v116
    %986 = vmatpush1.msra.mxu0 %v115
    %987 = vmatprep.subr.mxu0 %v120
    %988 = vmatpush1.msra.mxu0 %v119
    %989 = vmatprep.subr.mxu0 0.0
    %990 = vmatpush1.msra.mxu0 0.0
    %991 = vmatprep.subr.mxu0 0.0
    %992 = vmatpush1.msra.mxu0 0.0
    %993 = vmatprep.subr.mxu0 0.0
    %994 = vmatpush1.msra.mxu0 0.0
    %995 = vmatprep.subr.mxu0 0.0
    %996 = vmatpush1.msra.mxu0 0.0
    %997 = vmatprep.subr.mxu0 0.0
    %998 = vmatpush1.msra.mxu0 0.0
    %999 = vmatprep.subr.mxu0 0.0
    %1000 = vmatpush1.msra.mxu0 0.0
    %1001 = vmatprep.subr.mxu0 0.0
    %1002 = vmatpush1.msra.mxu0 0.0
    %1003 = vmatprep.subr.mxu0 0.0
    %1004 = vmatpush1.msra.mxu0 0.0
    %1005 = vmatprep.subr.mxu0 0.0
    %1006 = vmatpush1.msra.mxu0 0.0
    %1007 = vmatprep.subr.mxu0 0.0
    %1008 = vmatpush1.msra.mxu0 0.0
    %1009 = vmatprep.subr.mxu0 0.0
    %1010 = vmatpush1.msra.mxu0 0.0
    %1011 = vmatprep.subr.mxu0 0.0
    %1012 = vmatpush1.msra.mxu0 0.0
    %1013 = vmatprep.subr.mxu0 0.0
    %1014 = vmatpush1.msra.mxu0 0.0
    %1015 = vmatprep.subr.mxu0 0.0
    %1016 = vmatpush1.msra.mxu0 0.0
    %1017 = vmatprep.subr.mxu0 0.0
    %1018 = vmatpush1.msra.mxu0 0.0
    %1019 = vmatprep.subr.mxu0 0.0
    %1020 = vmatpush1.msra.mxu0 0.0
    %1021 = vmatprep.mubr.f32.mxu0 0.0
    %1022 = vmatmul.mubr.f32.gmra.mrb[0].mxu0 %v879
    %v1023 = vpop.f32.mrb[0].mxu0
    %v1024 = vadd.f32 0.0, %v1023
    %v1025 = vpop.f32.mrb[0].mxu0
    %v1026 = vadd.f32 0.0, %v1025
    %1027 = vdwg.mxu0
    %v1032 = vcombine.low %v953, %v955
    %v1033 = vcombine.low %v1024, %v1026
    %v1035 = vunpack.c.l.s4 1983009808
    %v1036 = vunpack.c.0.s8 %v1035
    %v1037 = vlaneseq
    %v1038 = vshrl.u32 %v1037, 7
    %v1039 = vsub.s32 %v1036, %v1038
    %v1040 = vrot.slane %v1032, %v1039
    %v1042 = vunpack.c.l.s4 1983009808
    %v1043 = vunpack.c.0.s8 %v1042
    %v1044 = vlaneseq
    %v1045 = vshrl.u32 %v1044, 7
    %v1046 = vsub.s32 %v1043, %v1045
    %v1047 = vrot.slane %v1033, %v1046
    %v1048 = vcombine.low %v1040, %v1047
    %v1050 = vadd.f32 %v885, %v1048
    %v1051 = vxor.u32 %v1050, 2147483648
    %v1052 = vmul.f32 %v1051, 1.442695
    %v1053 = vpow.pop %v1052
    %v1054 = vadd.f32 %v1053, 1.0
    %v1055 = vrcp.pop %v1054
    %v1056 = vmul.f32 1.0, %v1055
    %v1058 = vrot.slane %v1050, 6
    %v1060 = vtanh.pop %v1058
    %v1062 = vrot.slane %v1056, 2
    %v1064 = vmul.f32 %v1062, %v1060
    %v1065 = vmul.f32 %v1056, %v875
    %v1066 = vadd.f32 %v1064, %v1065
    %v1067 = vtanh.pop %v1066
    %v1068 = vrot.slane %v1056, 4
    %v1070 = vmul.f32 %v1068, %v1067
    %s1071 = scalar_lea.vmem [#allocation9], 8
    %1072 = vst [vmem:[%s1071] sm:$0x3] %v1070
    %s1073 = scalar_lea.vmem [#allocation10], 8
    %1074 = vst [vmem:[%s1073] sm:$0x3] %v1066
    %s1075 = scalar_lea.vmem [#allocation4], 40
    %v1076 = vld [vmem:[%s1075] sm:$0xff]
    %1077 = vmatprep.subr.mxu0 %v58
    %1078 = vmatpush1.msra.mxu0 %v57
    %1079 = vmatprep.subr.mxu0 %v62
    %1080 = vmatpush1.msra.mxu0 %v61
    %1081 = vmatprep.subr.mxu0 %v66
    %1082 = vmatpush1.msra.mxu0 %v65
    %1083 = vmatprep.subr.mxu0 %v70
    %1084 = vmatpush1.msra.mxu0 %v69
    %1085 = vmatprep.subr.mxu0 %v74
    %1086 = vmatpush1.msra.mxu0 %v73
    %1087 = vmatprep.subr.mxu0 %v78
    %1088 = vmatpush1.msra.mxu0 %v77
    %1089 = vmatprep.subr.mxu0 %v82
    %1090 = vmatpush1.msra.mxu0 %v81
    %1091 = vmatprep.subr.mxu0 %v86
    %1092 = vmatpush1.msra.mxu0 %v85
    %1093 = vmatprep.subr.mxu0 %v90
    %1094 = vmatpush1.msra.mxu0 %v89
    %1095 = vmatprep.subr.mxu0 %v94
    %1096 = vmatpush1.msra.mxu0 %v93
    %1097 = vmatprep.subr.mxu0 %v98
    %1098 = vmatpush1.msra.mxu0 %v97
    %1099 = vmatprep.subr.mxu0 %v102
    %1100 = vmatpush1.msra.mxu0 %v101
    %1101 = vmatprep.subr.mxu0 %v106
    %1102 = vmatpush1.msra.mxu0 %v105
    %1103 = vmatprep.subr.mxu0 %v110
    %1104 = vmatpush1.msra.mxu0 %v109
    %1105 = vmatprep.subr.mxu0 %v114
    %1106 = vmatpush1.msra.mxu0 %v113
    %1107 = vmatprep.subr.mxu0 %v118
    %1108 = vmatpush1.msra.mxu0 %v117
    %1109 = vmatprep.subr.mxu0 0.0
    %1110 = vmatpush1.msra.mxu0 0.0
    %1111 = vmatprep.subr.mxu0 0.0
    %1112 = vmatpush1.msra.mxu0 0.0
    %1113 = vmatprep.subr.mxu0 0.0
    %1114 = vmatpush1.msra.mxu0 0.0
    %1115 = vmatprep.subr.mxu0 0.0
    %1116 = vmatpush1.msra.mxu0 0.0
    %1117 = vmatprep.subr.mxu0 0.0
    %1118 = vmatpush1.msra.mxu0 0.0
    %1119 = vmatprep.subr.mxu0 0.0
    %1120 = vmatpush1.msra.mxu0 0.0
    %1121 = vmatprep.subr.mxu0 0.0
    %1122 = vmatpush1.msra.mxu0 0.0
    %1123 = vmatprep.subr.mxu0 0.0
    %1124 = vmatpush1.msra.mxu0 0.0
    %1125 = vmatprep.subr.mxu0 0.0
    %1126 = vmatpush1.msra.mxu0 0.0
    %1127 = vmatprep.subr.mxu0 0.0
    %1128 = vmatpush1.msra.mxu0 0.0
    %1129 = vmatprep.subr.mxu0 0.0
    %1130 = vmatpush1.msra.mxu0 0.0
    %1131 = vmatprep.subr.mxu0 0.0
    %1132 = vmatpush1.msra.mxu0 0.0
    %1133 = vmatprep.subr.mxu0 0.0
    %1134 = vmatpush1.msra.mxu0 0.0
    %1135 = vmatprep.subr.mxu0 0.0
    %1136 = vmatpush1.msra.mxu0 0.0
    %1137 = vmatprep.subr.mxu0 0.0
    %1138 = vmatpush1.msra.mxu0 0.0
    %1139 = vmatprep.subr.mxu0 0.0
    %1140 = vmatpush1.msra.mxu0 0.0
    %1141 = vmatprep.mubr.f32.mxu0 0.0
    %1142 = vmatmul.mubr.f32.gmra.mrb[0].mxu0 %v1070
    %v1143 = vpop.f32.mrb[0].mxu0
    %v1144 = vadd.f32 0.0, %v1143
    %v1145 = vpop.f32.mrb[0].mxu0
    %v1146 = vadd.f32 0.0, %v1145
    %1147 = vdwg.mxu0
    %1148 = vmatprep.subr.mxu0 %v60
    %1149 = vmatpush1.msra.mxu0 %v59
    %1150 = vmatprep.subr.mxu0 %v64
    %1151 = vmatpush1.msra.mxu0 %v63
    %1152 = vmatprep.subr.mxu0 %v68
    %1153 = vmatpush1.msra.mxu0 %v67
    %1154 = vmatprep.subr.mxu0 %v72
    %1155 = vmatpush1.msra.mxu0 %v71
    %1156 = vmatprep.subr.mxu0 %v76
    %1157 = vmatpush1.msra.mxu0 %v75
    %1158 = vmatprep.subr.mxu0 %v80
    %1159 = vmatpush1.msra.mxu0 %v79
    %1160 = vmatprep.subr.mxu0 %v84
    %1161 = vmatpush1.msra.mxu0 %v83
    %1162 = vmatprep.subr.mxu0 %v88
    %1163 = vmatpush1.msra.mxu0 %v87
    %1164 = vmatprep.subr.mxu0 %v92
    %1165 = vmatpush1.msra.mxu0 %v91
    %1166 = vmatprep.subr.mxu0 %v96
    %1167 = vmatpush1.msra.mxu0 %v95
    %1168 = vmatprep.subr.mxu0 %v100
    %1169 = vmatpush1.msra.mxu0 %v99
    %1170 = vmatprep.subr.mxu0 %v104
    %1171 = vmatpush1.msra.mxu0 %v103
    %1172 = vmatprep.subr.mxu0 %v108
    %1173 = vmatpush1.msra.mxu0 %v107
    %1174 = vmatprep.subr.mxu0 %v112
    %1175 = vmatpush1.msra.mxu0 %v111
    %1176 = vmatprep.subr.mxu0 %v116
    %1177 = vmatpush1.msra.mxu0 %v115
    %1178 = vmatprep.subr.mxu0 %v120
    %1179 = vmatpush1.msra.mxu0 %v119
    %1180 = vmatprep.subr.mxu0 0.0
    %1181 = vmatpush1.msra.mxu0 0.0
    %1182 = vmatprep.subr.mxu0 0.0
    %1183 = vmatpush1.msra.mxu0 0.0
    %1184 = vmatprep.subr.mxu0 0.0
    %1185 = vmatpush1.msra.mxu0 0.0
    %1186 = vmatprep.subr.mxu0 0.0
    %1187 = vmatpush1.msra.mxu0 0.0
    %1188 = vmatprep.subr.mxu0 0.0
    %1189 = vmatpush1.msra.mxu0 0.0
    %1190 = vmatprep.subr.mxu0 0.0
    %1191 = vmatpush1.msra.mxu0 0.0
    %1192 = vmatprep.subr.mxu0 0.0
    %1193 = vmatpush1.msra.mxu0 0.0
    %1194 = vmatprep.subr.mxu0 0.0
    %1195 = vmatpush1.msra.mxu0 0.0
    %1196 = vmatprep.subr.mxu0 0.0
    %1197 = vmatpush1.msra.mxu0 0.0
    %1198 = vmatprep.subr.mxu0 0.0
    %1199 = vmatpush1.msra.mxu0 0.0
    %1200 = vmatprep.subr.mxu0 0.0
    %1201 = vmatpush1.msra.mxu0 0.0
    %1202 = vmatprep.subr.mxu0 0.0
    %1203 = vmatpush1.msra.mxu0 0.0
    %1204 = vmatprep.subr.mxu0 0.0
    %1205 = vmatpush1.msra.mxu0 0.0
    %1206 = vmatprep.subr.mxu0 0.0
    %1207 = vmatpush1.msra.mxu0 0.0
    %1208 = vmatprep.subr.mxu0 0.0
    %1209 = vmatpush1.msra.mxu0 0.0
    %1210 = vmatprep.subr.mxu0 0.0
    %1211 = vmatpush1.msra.mxu0 0.0
    %1212 = vmatprep.mubr.f32.mxu0 0.0
    %1213 = vmatmul.mubr.f32.gmra.mrb[0].mxu0 %v1070
    %v1214 = vpop.f32.mrb[0].mxu0
    %v1215 = vadd.f32 0.0, %v1214
    %v1216 = vpop.f32.mrb[0].mxu0
    %v1217 = vadd.f32 0.0, %v1216
    %1218 = vdwg.mxu0
    %v1223 = vcombine.low %v1144, %v1146
    %v1224 = vcombine.low %v1215, %v1217
    %v1226 = vunpack.c.l.s4 1983009808
    %v1227 = vunpack.c.0.s8 %v1226
    %v1228 = vlaneseq
    %v1229 = vshrl.u32 %v1228, 7
    %v1230 = vsub.s32 %v1227, %v1229
    %v1231 = vrot.slane %v1223, %v1230
    %v1233 = vunpack.c.l.s4 1983009808
    %v1234 = vunpack.c.0.s8 %v1233
    %v1235 = vlaneseq
    %v1236 = vshrl.u32 %v1235, 7
    %v1237 = vsub.s32 %v1234, %v1236
    %v1238 = vrot.slane %v1224, %v1237
    %v1239 = vcombine.low %v1231, %v1238
    %v1241 = vadd.f32 %v1076, %v1239
    %v1242 = vxor.u32 %v1241, 2147483648
    %v1243 = vmul.f32 %v1242, 1.442695
    %v1244 = vpow.pop %v1243
    %v1245 = vadd.f32 %v1244, 1.0
    %v1246 = vrcp.pop %v1245
    %v1247 = vmul.f32 1.0, %v1246
    %v1249 = vrot.slane %v1241, 6
    %v1251 = vtanh.pop %v1249
    %v1253 = vrot.slane %v1247, 2
    %v1255 = vmul.f32 %v1253, %v1251
    %v1256 = vmul.f32 %v1247, %v1066
    %v1257 = vadd.f32 %v1255, %v1256
    %v1258 = vtanh.pop %v1257
    %v1259 = vrot.slane %v1247, 4
    %v1261 = vmul.f32 %v1259, %v1258
    %s1262 = scalar_lea.vmem [#allocation9], 10
    %1263 = vst [vmem:[%s1262] sm:$0x3] %v1261
    %s1264 = scalar_lea.vmem [#allocation10], 10
    %1265 = vst [vmem:[%s1264] sm:$0x3] %v1257
    %s1266 = scalar_lea.vmem [#allocation4], 48
    %v1267 = vld [vmem:[%s1266] sm:$0xff]
    %1268 = vmatprep.subr.mxu0 %v58
    %1269 = vmatpush1.msra.mxu0 %v57
    %1270 = vmatprep.subr.mxu0 %v62
    %1271 = vmatpush1.msra.mxu0 %v61
    %1272 = vmatprep.subr.mxu0 %v66
    %1273 = vmatpush1.msra.mxu0 %v65
    %1274 = vmatprep.subr.mxu0 %v70
    %1275 = vmatpush1.msra.mxu0 %v69
    %1276 = vmatprep.subr.mxu0 %v74
    %1277 = vmatpush1.msra.mxu0 %v73
    %1278 = vmatprep.subr.mxu0 %v78
    %1279 = vmatpush1.msra.mxu0 %v77
    %1280 = vmatprep.subr.mxu0 %v82
    %1281 = vmatpush1.msra.mxu0 %v81
    %1282 = vmatprep.subr.mxu0 %v86
    %1283 = vmatpush1.msra.mxu0 %v85
    %1284 = vmatprep.subr.mxu0 %v90
    %1285 = vmatpush1.msra.mxu0 %v89
    %1286 = vmatprep.subr.mxu0 %v94
    %1287 = vmatpush1.msra.mxu0 %v93
    %1288 = vmatprep.subr.mxu0 %v98
    %1289 = vmatpush1.msra.mxu0 %v97
    %1290 = vmatprep.subr.mxu0 %v102
    %1291 = vmatpush1.msra.mxu0 %v101
    %1292 = vmatprep.subr.mxu0 %v106
    %1293 = vmatpush1.msra.mxu0 %v105
    %1294 = vmatprep.subr.mxu0 %v110
    %1295 = vmatpush1.msra.mxu0 %v109
    %1296 = vmatprep.subr.mxu0 %v114
    %1297 = vmatpush1.msra.mxu0 %v113
    %1298 = vmatprep.subr.mxu0 %v118
    %1299 = vmatpush1.msra.mxu0 %v117
    %1300 = vmatprep.subr.mxu0 0.0
    %1301 = vmatpush1.msra.mxu0 0.0
    %1302 = vmatprep.subr.mxu0 0.0
    %1303 = vmatpush1.msra.mxu0 0.0
    %1304 = vmatprep.subr.mxu0 0.0
    %1305 = vmatpush1.msra.mxu0 0.0
    %1306 = vmatprep.subr.mxu0 0.0
    %1307 = vmatpush1.msra.mxu0 0.0
    %1308 = vmatprep.subr.mxu0 0.0
    %1309 = vmatpush1.msra.mxu0 0.0
    %1310 = vmatprep.subr.mxu0 0.0
    %1311 = vmatpush1.msra.mxu0 0.0
    %1312 = vmatprep.subr.mxu0 0.0
    %1313 = vmatpush1.msra.mxu0 0.0
    %1314 = vmatprep.subr.mxu0 0.0
    %1315 = vmatpush1.msra.mxu0 0.0
    %1316 = vmatprep.subr.mxu0 0.0
    %1317 = vmatpush1.msra.mxu0 0.0
    %1318 = vmatprep.subr.mxu0 0.0
    %1319 = vmatpush1.msra.mxu0 0.0
    %1320 = vmatprep.subr.mxu0 0.0
    %1321 = vmatpush1.msra.mxu0 0.0
    %1322 = vmatprep.subr.mxu0 0.0
    %1323 = vmatpush1.msra.mxu0 0.0
    %1324 = vmatprep.subr.mxu0 0.0
    %1325 = vmatpush1.msra.mxu0 0.0
    %1326 = vmatprep.subr.mxu0 0.0
    %1327 = vmatpush1.msra.mxu0 0.0
    %1328 = vmatprep.subr.mxu0 0.0
    %1329 = vmatpush1.msra.mxu0 0.0
    %1330 = vmatprep.subr.mxu0 0.0
    %1331 = vmatpush1.msra.mxu0 0.0
    %1332 = vmatprep.mubr.f32.mxu0 0.0
    %1333 = vmatmul.mubr.f32.gmra.mrb[0].mxu0 %v1261
    %v1334 = vpop.f32.mrb[0].mxu0
    %v1335 = vadd.f32 0.0, %v1334
    %v1336 = vpop.f32.mrb[0].mxu0
    %v1337 = vadd.f32 0.0, %v1336
    %1338 = vdwg.mxu0
    %1339 = vmatprep.subr.mxu0 %v60
    %1340 = vmatpush1.msra.mxu0 %v59
    %1341 = vmatprep.subr.mxu0 %v64
    %1342 = vmatpush1.msra.mxu0 %v63
    %1343 = vmatprep.subr.mxu0 %v68
    %1344 = vmatpush1.msra.mxu0 %v67
    %1345 = vmatprep.subr.mxu0 %v72
    %1346 = vmatpush1.msra.mxu0 %v71
    %1347 = vmatprep.subr.mxu0 %v76
    %1348 = vmatpush1.msra.mxu0 %v75
    %1349 = vmatprep.subr.mxu0 %v80
    %1350 = vmatpush1.msra.mxu0 %v79
    %1351 = vmatprep.subr.mxu0 %v84
    %1352 = vmatpush1.msra.mxu0 %v83
    %1353 = vmatprep.subr.mxu0 %v88
    %1354 = vmatpush1.msra.mxu0 %v87
    %1355 = vmatprep.subr.mxu0 %v92
    %1356 = vmatpush1.msra.mxu0 %v91
    %1357 = vmatprep.subr.mxu0 %v96
    %1358 = vmatpush1.msra.mxu0 %v95
    %1359 = vmatprep.subr.mxu0 %v100
    %1360 = vmatpush1.msra.mxu0 %v99
    %1361 = vmatprep.subr.mxu0 %v104
    %1362 = vmatpush1.msra.mxu0 %v103
    %1363 = vmatprep.subr.mxu0 %v108
    %1364 = vmatpush1.msra.mxu0 %v107
    %1365 = vmatprep.subr.mxu0 %v112
    %1366 = vmatpush1.msra.mxu0 %v111
    %1367 = vmatprep.subr.mxu0 %v116
    %1368 = vmatpush1.msra.mxu0 %v115
    %1369 = vmatprep.subr.mxu0 %v120
    %1370 = vmatpush1.msra.mxu0 %v119
    %1371 = vmatprep.subr.mxu0 0.0
    %1372 = vmatpush1.msra.mxu0 0.0
    %1373 = vmatprep.subr.mxu0 0.0
    %1374 = vmatpush1.msra.mxu0 0.0
    %1375 = vmatprep.subr.mxu0 0.0
    %1376 = vmatpush1.msra.mxu0 0.0
    %1377 = vmatprep.subr.mxu0 0.0
    %1378 = vmatpush1.msra.mxu0 0.0
    %1379 = vmatprep.subr.mxu0 0.0
    %1380 = vmatpush1.msra.mxu0 0.0
    %1381 = vmatprep.subr.mxu0 0.0
    %1382 = vmatpush1.msra.mxu0 0.0
    %1383 = vmatprep.subr.mxu0 0.0
    %1384 = vmatpush1.msra.mxu0 0.0
    %1385 = vmatprep.subr.mxu0 0.0
    %1386 = vmatpush1.msra.mxu0 0.0
    %1387 = vmatprep.subr.mxu0 0.0
    %1388 = vmatpush1.msra.mxu0 0.0
    %1389 = vmatprep.subr.mxu0 0.0
    %1390 = vmatpush1.msra.mxu0 0.0
    %1391 = vmatprep.subr.mxu0 0.0
    %1392 = vmatpush1.msra.mxu0 0.0
    %1393 = vmatprep.subr.mxu0 0.0
    %1394 = vmatpush1.msra.mxu0 0.0
    %1395 = vmatprep.subr.mxu0 0.0
    %1396 = vmatpush1.msra.mxu0 0.0
    %1397 = vmatprep.subr.mxu0 0.0
    %1398 = vmatpush1.msra.mxu0 0.0
    %1399 = vmatprep.subr.mxu0 0.0
    %1400 = vmatpush1.msra.mxu0 0.0
    %1401 = vmatprep.subr.mxu0 0.0
    %1402 = vmatpush1.msra.mxu0 0.0
    %1403 = vmatprep.mubr.f32.mxu0 0.0
    %1404 = vmatmul.mubr.f32.gmra.mrb[0].mxu0 %v1261
    %v1405 = vpop.f32.mrb[0].mxu0
    %v1406 = vadd.f32 0.0, %v1405
    %v1407 = vpop.f32.mrb[0].mxu0
    %v1408 = vadd.f32 0.0, %v1407
    %1409 = vdwg.mxu0
    %v1414 = vcombine.low %v1335, %v1337
    %v1415 = vcombine.low %v1406, %v1408
    %v1417 = vunpack.c.l.s4 1983009808
    %v1418 = vunpack.c.0.s8 %v1417
    %v1419 = vlaneseq
    %v1420 = vshrl.u32 %v1419, 7
    %v1421 = vsub.s32 %v1418, %v1420
    %v1422 = vrot.slane %v1414, %v1421
    %v1424 = vunpack.c.l.s4 1983009808
    %v1425 = vunpack.c.0.s8 %v1424
    %v1426 = vlaneseq
    %v1427 = vshrl.u32 %v1426, 7
    %v1428 = vsub.s32 %v1425, %v1427
    %v1429 = vrot.slane %v1415, %v1428
    %v1430 = vcombine.low %v1422, %v1429
    %v1432 = vadd.f32 %v1267, %v1430
    %v1433 = vxor.u32 %v1432, 2147483648
    %v1434 = vmul.f32 %v1433, 1.442695
    %v1435 = vpow.pop %v1434
    %v1436 = vadd.f32 %v1435, 1.0
    %v1437 = vrcp.pop %v1436
    %v1438 = vmul.f32 1.0, %v1437
    %v1440 = vrot.slane %v1432, 6
    %v1442 = vtanh.pop %v1440
    %v1444 = vrot.slane %v1438, 2
    %v1446 = vmul.f32 %v1444, %v1442
    %v1447 = vmul.f32 %v1438, %v1257
    %v1448 = vadd.f32 %v1446, %v1447
    %v1449 = vtanh.pop %v1448
    %v1450 = vrot.slane %v1438, 4
    %v1452 = vmul.f32 %v1450, %v1449
    %s1453 = scalar_lea.vmem [#allocation9], 12
    %1454 = vst [vmem:[%s1453] sm:$0x3] %v1452
    %s1455 = scalar_lea.vmem [#allocation10], 12
    %1456 = vst [vmem:[%s1455] sm:$0x3] %v1448
    %s1457 = scalar_lea.vmem [#allocation4], 56
    %v1458 = vld [vmem:[%s1457] sm:$0xff]
    %1459 = vmatprep.subr.mxu0 %v58
    %1460 = vmatpush1.msra.mxu0 %v57
    %1461 = vmatprep.subr.mxu0 %v62
    %1462 = vmatpush1.msra.mxu0 %v61
    %1463 = vmatprep.subr.mxu0 %v66
    %1464 = vmatpush1.msra.mxu0 %v65
    %1465 = vmatprep.subr.mxu0 %v70
    %1466 = vmatpush1.msra.mxu0 %v69
    %1467 = vmatprep.subr.mxu0 %v74
    %1468 = vmatpush1.msra.mxu0 %v73
    %1469 = vmatprep.subr.mxu0 %v78
    %1470 = vmatpush1.msra.mxu0 %v77
    %1471 = vmatprep.subr.mxu0 %v82
    %1472 = vmatpush1.msra.mxu0 %v81
    %1473 = vmatprep.subr.mxu0 %v86
    %1474 = vmatpush1.msra.mxu0 %v85
    %1475 = vmatprep.subr.mxu0 %v90
    %1476 = vmatpush1.msra.mxu0 %v89
    %1477 = vmatprep.subr.mxu0 %v94
    %1478 = vmatpush1.msra.mxu0 %v93
    %1479 = vmatprep.subr.mxu0 %v98
    %1480 = vmatpush1.msra.mxu0 %v97
    %1481 = vmatprep.subr.mxu0 %v102
    %1482 = vmatpush1.msra.mxu0 %v101
    %1483 = vmatprep.subr.mxu0 %v106
    %1484 = vmatpush1.msra.mxu0 %v105
    %1485 = vmatprep.subr.mxu0 %v110
    %1486 = vmatpush1.msra.mxu0 %v109
    %1487 = vmatprep.subr.mxu0 %v114
    %1488 = vmatpush1.msra.mxu0 %v113
    %1489 = vmatprep.subr.mxu0 %v118
    %1490 = vmatpush1.msra.mxu0 %v117
    %1491 = vmatprep.subr.mxu0 0.0
    %1492 = vmatpush1.msra.mxu0 0.0
    %1493 = vmatprep.subr.mxu0 0.0
    %1494 = vmatpush1.msra.mxu0 0.0
    %1495 = vmatprep.subr.mxu0 0.0
    %1496 = vmatpush1.msra.mxu0 0.0
    %1497 = vmatprep.subr.mxu0 0.0
    %1498 = vmatpush1.msra.mxu0 0.0
    %1499 = vmatprep.subr.mxu0 0.0
    %1500 = vmatpush1.msra.mxu0 0.0
    %1501 = vmatprep.subr.mxu0 0.0
    %1502 = vmatpush1.msra.mxu0 0.0
    %1503 = vmatprep.subr.mxu0 0.0
    %1504 = vmatpush1.msra.mxu0 0.0
    %1505 = vmatprep.subr.mxu0 0.0
    %1506 = vmatpush1.msra.mxu0 0.0
    %1507 = vmatprep.subr.mxu0 0.0
    %1508 = vmatpush1.msra.mxu0 0.0
    %1509 = vmatprep.subr.mxu0 0.0
    %1510 = vmatpush1.msra.mxu0 0.0
    %1511 = vmatprep.subr.mxu0 0.0
    %1512 = vmatpush1.msra.mxu0 0.0
    %1513 = vmatprep.subr.mxu0 0.0
    %1514 = vmatpush1.msra.mxu0 0.0
    %1515 = vmatprep.subr.mxu0 0.0
    %1516 = vmatpush1.msra.mxu0 0.0
    %1517 = vmatprep.subr.mxu0 0.0
    %1518 = vmatpush1.msra.mxu0 0.0
    %1519 = vmatprep.subr.mxu0 0.0
    %1520 = vmatpush1.msra.mxu0 0.0
    %1521 = vmatprep.subr.mxu0 0.0
    %1522 = vmatpush1.msra.mxu0 0.0
    %1523 = vmatprep.mubr.f32.mxu0 0.0
    %1524 = vmatmul.mubr.f32.gmra.mrb[0].mxu0 %v1452
    %v1525 = vpop.f32.mrb[0].mxu0
    %v1526 = vadd.f32 0.0, %v1525
    %v1527 = vpop.f32.mrb[0].mxu0
    %v1528 = vadd.f32 0.0, %v1527
    %1529 = vdwg.mxu0
    %1530 = vmatprep.subr.mxu0 %v60
    %1531 = vmatpush1.msra.mxu0 %v59
    %1532 = vmatprep.subr.mxu0 %v64
    %1533 = vmatpush1.msra.mxu0 %v63
    %1534 = vmatprep.subr.mxu0 %v68
    %1535 = vmatpush1.msra.mxu0 %v67
    %1536 = vmatprep.subr.mxu0 %v72
    %1537 = vmatpush1.msra.mxu0 %v71
    %1538 = vmatprep.subr.mxu0 %v76
    %1539 = vmatpush1.msra.mxu0 %v75
    %1540 = vmatprep.subr.mxu0 %v80
    %1541 = vmatpush1.msra.mxu0 %v79
    %1542 = vmatprep.subr.mxu0 %v84
    %1543 = vmatpush1.msra.mxu0 %v83
    %1544 = vmatprep.subr.mxu0 %v88
    %1545 = vmatpush1.msra.mxu0 %v87
    %1546 = vmatprep.subr.mxu0 %v92
    %1547 = vmatpush1.msra.mxu0 %v91
    %1548 = vmatprep.subr.mxu0 %v96
    %1549 = vmatpush1.msra.mxu0 %v95
    %1550 = vmatprep.subr.mxu0 %v100
    %1551 = vmatpush1.msra.mxu0 %v99
    %1552 = vmatprep.subr.mxu0 %v104
    %1553 = vmatpush1.msra.mxu0 %v103
    %1554 = vmatprep.subr.mxu0 %v108
    %1555 = vmatpush1.msra.mxu0 %v107
    %1556 = vmatprep.subr.mxu0 %v112
    %1557 = vmatpush1.msra.mxu0 %v111
    %1558 = vmatprep.subr.mxu0 %v116
    %1559 = vmatpush1.msra.mxu0 %v115
    %1560 = vmatprep.subr.mxu0 %v120
    %1561 = vmatpush1.msra.mxu0 %v119
    %1562 = vmatprep.subr.mxu0 0.0
    %1563 = vmatpush1.msra.mxu0 0.0
    %1564 = vmatprep.subr.mxu0 0.0
    %1565 = vmatpush1.msra.mxu0 0.0
    %1566 = vmatprep.subr.mxu0 0.0
    %1567 = vmatpush1.msra.mxu0 0.0
    %1568 = vmatprep.subr.mxu0 0.0
    %1569 = vmatpush1.msra.mxu0 0.0
    %1570 = vmatprep.subr.mxu0 0.0
    %1571 = vmatpush1.msra.mxu0 0.0
    %1572 = vmatprep.subr.mxu0 0.0
    %1573 = vmatpush1.msra.mxu0 0.0
    %1574 = vmatprep.subr.mxu0 0.0
    %1575 = vmatpush1.msra.mxu0 0.0
    %1576 = vmatprep.subr.mxu0 0.0
    %1577 = vmatpush1.msra.mxu0 0.0
    %1578 = vmatprep.subr.mxu0 0.0
    %1579 = vmatpush1.msra.mxu0 0.0
    %1580 = vmatprep.subr.mxu0 0.0
    %1581 = vmatpush1.msra.mxu0 0.0
    %1582 = vmatprep.subr.mxu0 0.0
    %1583 = vmatpush1.msra.mxu0 0.0
    %1584 = vmatprep.subr.mxu0 0.0
    %1585 = vmatpush1.msra.mxu0 0.0
    %1586 = vmatprep.subr.mxu0 0.0
    %1587 = vmatpush1.msra.mxu0 0.0
    %1588 = vmatprep.subr.mxu0 0.0
    %1589 = vmatpush1.msra.mxu0 0.0
    %1590 = vmatprep.subr.mxu0 0.0
    %1591 = vmatpush1.msra.mxu0 0.0
    %1592 = vmatprep.subr.mxu0 0.0
    %1593 = vmatpush1.msra.mxu0 0.0
    %1594 = vmatprep.mubr.f32.mxu0 0.0
    %1595 = vmatmul.mubr.f32.gmra.mrb[0].mxu0 %v1452
    %v1596 = vpop.f32.mrb[0].mxu0
    %v1597 = vadd.f32 0.0, %v1596
    %v1598 = vpop.f32.mrb[0].mxu0
    %v1599 = vadd.f32 0.0, %v1598
    %1600 = vdwg.mxu0
    %v1605 = vcombine.low %v1526, %v1528
    %v1606 = vcombine.low %v1597, %v1599
    %v1608 = vunpack.c.l.s4 1983009808
    %v1609 = vunpack.c.0.s8 %v1608
    %v1610 = vlaneseq
    %v1611 = vshrl.u32 %v1610, 7
    %v1612 = vsub.s32 %v1609, %v1611
    %v1613 = vrot.slane %v1605, %v1612
    %v1615 = vunpack.c.l.s4 1983009808
    %v1616 = vunpack.c.0.s8 %v1615
    %v1617 = vlaneseq
    %v1618 = vshrl.u32 %v1617, 7
    %v1619 = vsub.s32 %v1616, %v1618
    %v1620 = vrot.slane %v1606, %v1619
    %v1621 = vcombine.low %v1613, %v1620
    %v1623 = vadd.f32 %v1458, %v1621
    %v1624 = vxor.u32 %v1623, 2147483648
    %v1625 = vmul.f32 %v1624, 1.442695
    %v1626 = vpow.pop %v1625
    %v1627 = vadd.f32 %v1626, 1.0
    %v1628 = vrcp.pop %v1627
    %v1629 = vmul.f32 1.0, %v1628
    %v1631 = vrot.slane %v1623, 6
    %v1633 = vtanh.pop %v1631
    %v1635 = vrot.slane %v1629, 2
    %v1637 = vmul.f32 %v1635, %v1633
    %v1638 = vmul.f32 %v1629, %v1448
    %v1639 = vadd.f32 %v1637, %v1638
    %v1640 = vtanh.pop %v1639
    %v1641 = vrot.slane %v1629, 4
    %v1643 = vmul.f32 %v1641, %v1640
    %s1644 = scalar_lea.vmem [#allocation9], 14
    %1645 = vst [vmem:[%s1644] sm:$0x3] %v1643
    %s1646 = scalar_lea.vmem [#allocation10], 14
    %1647 = vst [vmem:[%s1646] sm:$0x3] %v1639
    %1648 = vst [vmem:[#allocation2] sm:$0x3] %v1643
    %1649 = vst [vmem:[#allocation3] sm:$0x3] %v1639
    // Predicated region
    $region30: #{tpu_custom_call.1} parent=1 // pred_check
      _
    $region31: #{tpu_custom_call.1} parent=1 // pred_check_branch
      %1651 = sbr.rel (0) target = $region33
    $region32: #{tpu_custom_call.1} parent=1 // pred_region
      %s1653 = ssub.s32 256, 256
      %1654 = vsyncadd [#allocation6], %s1653
      %s1655 = sshll.u32 [#allocation9], 4
      %s1656 = int_to_ptr.vmem [resolvable:$true] %s1655
      %1661 = dma.vmem_to_hbm [thread:$0]  %s1656, 256, %s4, [#allocation6], 32, 32, 2
    $region33: #{tpu_custom_call.1} parent=1 // pred_fallthru
      _
    // Predicated region
    $region34: #{tpu_custom_call.1} parent=1 // pred_check
      _
    $region35: #{tpu_custom_call.1} parent=1 // pred_check_branch
      %1663 = sbr.rel (0) target = $region37
    $region36: #{tpu_custom_call.1} parent=1 // pred_region
      %s1665 = ssub.s32 256, 256
      %1666 = vsyncadd [#allocation11], %s1665
      %s1667 = sshll.u32 [#allocation10], 4
      %s1668 = int_to_ptr.vmem [resolvable:$true] %s1667
      %1673 = dma.vmem_to_hbm [thread:$0]  %s1668, 256, %s5, [#allocation11], 32, 32, 2
    $region37: #{tpu_custom_call.1} parent=1 // pred_fallthru
      _
    // Predicated region
    $region38: #{tpu_custom_call.1} parent=1 // pred_check
      _
    $region39: #{tpu_custom_call.1} parent=1 // pred_check_branch
      %1675 = sbr.rel (0) target = $region41
    $region40: #{tpu_custom_call.1} parent=1 // pred_region
      %1676 = dma.done [#allocation6], 256
    $region41: #{tpu_custom_call.1} parent=1 // pred_fallthru
      _
    // Predicated region
    $region42: #{tpu_custom_call.1} parent=1 // pred_check
      _
    $region43: #{tpu_custom_call.1} parent=1 // pred_check_branch
      %1678 = sbr.rel (0) target = $region45
    $region44: #{tpu_custom_call.1} parent=1 // pred_region
      %1679 = dma.done [#allocation11], 256
    $region45: #{tpu_custom_call.1} parent=1 // pred_fallthru
      _
    %1680 = vsyncpa [#allocation5], 1
    %1681 = vsyncpa [#allocation8], 1
    %1682 = vsyncpa [#allocation6], 1
    %1683 = vsyncpa [#allocation11], 1

</llo_original>
